<compile_context>
chip_gen: v7x
topology: tpu7x:2x2x1
jax: 0.10.0
libtpu: 0.0.40
codegen_flags: <defaults>
</compile_context>

<pallas_src>
import functools

import jax
import jax.numpy as jnp
from jax import lax
from jax.experimental import pallas as pl
from jax.experimental.pallas import tpu as pltpu


def _round_up(x, m):
    return (x + m - 1) // m * m


def _cdiv(a, b):
    return -(-a // b)


def _mem_params():
    """Per-generation (budget, tile cap, vmem_limit_bytes)."""
    cap = None
    try:
        cap = getattr(pltpu.get_tpu_info(), "vmem_capacity_bytes", None)
    except Exception:
        cap = None
    if cap is not None and cap >= 100 * 1024 * 1024:          # v5e / v6e (128 MiB)
        return 24 * 1024 * 1024, 4096, 64 * 1024 * 1024
    return 10 * 1024 * 1024, 2048, 40 * 1024 * 1024           # v7x / unknown (64 MiB)


def _cout_tiling(cout):
    if cout <= 256:
        return cout, cout, 1
    # TODO(synk): 128-row tiles would suit v5e's 4x128x128 MXU slightly better.
    tcout = 256
    cout_p = _round_up(cout, tcout)
    return cout_p, tcout, cout_p // tcout


def _valid_mask(sp, tile, n_sp, w_grid, w_valid, h_valid):
    """f32 validity mask over the flattened (padded) conv grid + per-tile counts."""
    pos = jnp.arange(sp, dtype=jnp.int32)
    v = ((pos % w_grid < w_valid) & (pos // w_grid < h_valid)).astype(jnp.float32)
    return v.reshape(n_sp, 1, tile), v.reshape(n_sp, tile).sum(axis=1)


def _tile_stats(acc, valid):
    """Per-tile masked sum and centered (per-tile-mean shifted) sum of squares."""
    cnt = jnp.maximum(jnp.sum(valid), 1.0)
    s1 = jnp.sum(acc * valid, axis=1, keepdims=True)          # (TCout, 1)
    m0 = s1 / cnt
    d = (acc - m0) * valid
    s2 = jnp.sum(d * d, axis=1, keepdims=True)                 # (TCout, 1)
    return s1, s2


def _make_fused_conv_kernel(shifts, tile, n_win):
    """stride==1 path: K*K taps are lane-shifted windows of adjacent tiles."""
    def kernel(*refs):
        x_refs = refs[:n_win]
        w_ref, mask_ref = refs[n_win], refs[n_win + 1]
        y_ref, s1_ref, s2_ref = refs[n_win + 2:]
        wins = [r[0] for r in x_refs]                          # each (Cin_p, tile) bf16
        xcat = wins[0] if n_win == 1 else jnp.concatenate(wins, axis=1)
        acc = None
        for t, s in enumerate(shifts):                         # static K*K unroll
            part = jnp.dot(w_ref[t], xcat[:, s:s + tile],
                           preferred_element_type=jnp.float32)
            acc = part if acc is None else acc + part
        y_ref[0] = acc
        s1, s2 = _tile_stats(acc, mask_ref[0])
        s1_ref[0, 0] = s1
        s2_ref[0, 0] = s2
    return kernel


def _gemm_conv_kernel(cols_ref, w_ref, mask_ref, y_ref, s1_ref, s2_ref):
    """stride>1 fallback: one lane-dense GEMM on im2col patches + tile stats."""
    acc = jnp.dot(w_ref[...], cols_ref[0], preferred_element_type=jnp.float32)
    y_ref[0] = acc
    s1, s2 = _tile_stats(acc, mask_ref[0])
    s1_ref[0, 0] = s1
    s2_ref[0, 0] = s2


def _bn_apply_kernel(y_ref, scale_ref, shift_ref, o_ref):
    """BN scale/shift FMA fused with the crop back to (N, Cout, Ho, Wo)."""
    c, ho, wo = o_ref.shape[1], o_ref.shape[2], o_ref.shape[3]
    y = y_ref[0]
    o_ref[0] = y[:c, :ho, :wo] * scale_ref[...] + shift_ref[...]


@functools.partial(jax.jit,
                   static_argnames=("stride", "padding", "eps", "tile_override"))
def conv_block(x, w, b, gamma, beta, *, stride, padding, eps=1e-5,
               tile_override=None):
    """Conv2d (+bias) followed by training-mode BatchNorm2d (nn.BatchNorm2d).

    x: (N, Cin, H, W) f32;  w: (Cout, Cin, K, K);  b/gamma/beta: (Cout,).
    The conv bias is accepted for API parity but not applied: a bias followed
    by training-mode BatchNorm cancels exactly.  `tile_override` (multiple of
    128) forces a spatial tile size, used by the tests to exercise multi-tile
    paths on small inputs.
    """
    del b
    N, Cin, H, W = x.shape
    Cout, _, K, _ = w.shape
    Ho = (H + 2 * padding - K) // stride + 1
    Wo = (W + 2 * padding - K) // stride + 1
    HoWo = Ho * Wo

    budget, t_cap, vmem_limit = _mem_params()
    Cout_p, TCout, n_co = _cout_tiling(Cout)
    cparams = pltpu.CompilerParams(
        dimension_semantics=("parallel", "parallel", "parallel"),
        vmem_limit_bytes=vmem_limit)

    def _run_conv(kernel, in_specs, args, T, n_sp, SP):
        return pl.pallas_call(
            kernel,
            out_shape=(jax.ShapeDtypeStruct((N, Cout_p, SP), jnp.float32),
                       jax.ShapeDtypeStruct((N, n_sp, Cout_p, 1), jnp.float32),
                       jax.ShapeDtypeStruct((N, n_sp, Cout_p, 1), jnp.float32)),
            grid=(N, n_co, n_sp),
            in_specs=in_specs,
            out_specs=(pl.BlockSpec((1, TCout, T), lambda n, co, j: (n, co, j)),
                       pl.BlockSpec((1, 1, TCout, 1), lambda n, co, j: (n, j, co, 0)),
                       pl.BlockSpec((1, 1, TCout, 1), lambda n, co, j: (n, j, co, 0))),
            compiler_params=cparams,
        )(*args)

    if stride == 1:
        # ------------------ fused path: no im2col materialization ------------
        Hp, Wp = H + 2 * padding, W + 2 * padding
        Cin_p = _round_up(Cin, 8)
        L = Hp * Wp
        s_max = (K - 1) * (Wp + 1)                     # largest flat tap shift
        if tile_override is not None:
            T = tile_override
            n_win = 1 + _cdiv(s_max, T) if s_max > 0 else 1
        else:
            n_win = 2 if s_max > 0 else 1
            T = 128
            for _ in range(4):                         # n_win and T are coupled
                w_bytes = 2 * (K * K * TCout * Cin_p * 2)        # db bf16 weights
                per_lane = (4 * Cin_p * n_win                    # x windows, 2 bufs, bf16
                            + 2 * Cin_p * (n_win + 1)            # xcat + live tap slice
                            + 12 * TCout)                        # y (2 bufs f32) + acc
                t_fit = max(128, (budget - w_bytes) // per_lane // 128 * 128)
                T = max(128, min(t_cap, t_fit, _round_up(L, 128)))
                n_win_new = 1 + _cdiv(s_max, T) if s_max > 0 else 1
                if n_win_new == n_win:
                    break
                n_win = n_win_new
        n_sp = _cdiv(L, T)
        SP = n_sp * T

        xb = x.astype(jnp.bfloat16)
        xp4 = jnp.pad(xb, ((0, 0), (0, Cin_p - Cin),
                           (padding, padding), (padding, padding)))
        xf = xp4.reshape(N, Cin_p, L)
        tail = SP + (n_win - 1) * T - L
        if tail:
            xf = jnp.pad(xf, ((0, 0), (0, 0), (0, tail)))

        w_taps = jnp.transpose(w, (2, 3, 0, 1)).reshape(K * K, Cout, Cin)
        w_taps = jnp.pad(w_taps, ((0, 0), (0, Cout_p - Cout),
                                  (0, Cin_p - Cin))).astype(jnp.bfloat16)

        mask, cnt_tiles = _valid_mask(SP, T, n_sp, Wp, Wo, Ho)
        shifts = tuple(ki * Wp + kj for ki in range(K) for kj in range(K))
        kernel = _make_fused_conv_kernel(shifts, T, n_win)

        in_specs = [pl.BlockSpec((1, Cin_p, T),
                                 lambda n, co, j, off=off: (n, 0, j + off))
                    for off in range(n_win)]
        in_specs += [pl.BlockSpec((K * K, TCout, Cin_p), lambda n, co, j: (0, co, 0)),
                     pl.BlockSpec((1, 1, T), lambda n, co, j: (j, 0, 0))]
        args = [xf] * n_win + [w_taps, mask]

        y, s1, s2 = _run_conv(kernel, in_specs, args, T, n_sp, SP)
        Hy, Wy = Hp, Wp
    else:
        # --------------- fallback path for stride > 1: im2col GEMM -----------
        Kdim = Cin * K * K
        if tile_override is not None:
            T = tile_override
        elif HoWo <= t_cap:
            T = HoWo
        else:
            w_bytes = 2 * (Kdim * TCout * 2)
            per_lane = 4 * Kdim + 12 * TCout
            t_fit = (budget - w_bytes) // per_lane // 128 * 128
            T = max(128, min(t_cap, t_fit))
        n_sp = _cdiv(HoWo, T)
        SP = n_sp * T

        xb = x.astype(jnp.bfloat16)
        xp4 = jnp.pad(xb, ((0, 0), (0, 0),
                           (padding, padding), (padding, padding)))
        patches = [xp4[:, :, i:i + stride * Ho:stride, j:j + stride * Wo:stride]
                   for i in range(K) for j in range(K)]
        colsT = jnp.stack(patches, axis=2).reshape(N, Kdim, HoWo)
        if SP != HoWo:
            colsT = jnp.pad(colsT, ((0, 0), (0, 0), (0, SP - HoWo)))

        w_mat = jnp.pad(w.reshape(Cout, Kdim),
                        ((0, Cout_p - Cout), (0, 0))).astype(jnp.bfloat16)

        mask, cnt_tiles = _valid_mask(SP, T, n_sp, Wo, Wo, Ho)
        in_specs = [pl.BlockSpec((1, Kdim, T), lambda n, co, j: (n, 0, j)),
                    pl.BlockSpec((TCout, Kdim), lambda n, co, j: (co, 0)),
                    pl.BlockSpec((1, 1, T), lambda n, co, j: (j, 0, 0))]
        y, s1, s2 = _run_conv(_gemm_conv_kernel, in_specs,
                              [colsT, w_mat, mask], T, n_sp, SP)
        Hy, Wy, L = Ho, Wo, HoWo

    # ---- exact Chan-style merge of per-(image, tile) partial statistics ----
    total = float(N * HoWo)
    s1 = s1[..., 0]                                   # (N, n_sp, Cout_p)
    s2 = s2[..., 0]
    c = jnp.maximum(cnt_tiles, 1.0)[None, :, None]
    mean_t = s1 / c
    mean = jnp.sum(s1, axis=(0, 1)) / total           # (Cout_p,)
    m2 = (jnp.sum(s2, axis=(0, 1))
          + jnp.sum(cnt_tiles[None, :, None]
                    * (mean_t - mean[None, None, :]) ** 2, axis=(0, 1)))
    var = jnp.maximum(m2 / total, 0.0)                # biased variance (BN fwd)
    inv = lax.rsqrt(var[:Cout] + eps)
    scale3 = (gamma * inv).reshape(Cout, 1, 1).astype(jnp.float32)
    shift3 = (beta - mean[:Cout] * gamma * inv).reshape(Cout, 1, 1).astype(jnp.float32)

    # ---- kernel 2: BN apply fused with the crop to (N, Cout, Ho, Wo) --------
    if SP != L:
        # TODO(synk): one flat tail-trim pass; removable when T divides Hp*Wp.
        y = y[:, :, :L]
    y4 = y.reshape(N, Cout_p, Hy, Wy)

    if Cout_p == Cout:
        tc2 = Cout
        while tc2 > 8 and tc2 % 2 == 0 and \
                4 * tc2 * (3 * Hy * Wy + 2 * Ho * Wo) > budget:
            tc2 //= 2
        tc2y, n_c2 = tc2, Cout // tc2
    else:
        tc2, tc2y, n_c2 = Cout, Cout_p, 1

    out = pl.pallas_call(
        _bn_apply_kernel,
        out_shape=jax.ShapeDtypeStruct((N, Cout, Ho, Wo), jnp.float32),
        grid=(N, n_c2),
        in_specs=[pl.BlockSpec((1, tc2y, Hy, Wy), lambda n, ci: (n, ci, 0, 0)),
                  pl.BlockSpec((tc2, 1, 1), lambda n, ci: (ci, 0, 0)),
                  pl.BlockSpec((tc2, 1, 1), lambda n, ci: (ci, 0, 0))],
        out_specs=pl.BlockSpec((1, tc2, Ho, Wo), lambda n, ci: (n, ci, 0, 0)),
        compiler_params=pltpu.CompilerParams(
            dimension_semantics=("parallel", "parallel"),
            vmem_limit_bytes=vmem_limit),
    )(y4, scale3, shift3)
    return out


def _reference(x, w, b, gamma, beta, stride, padding, eps=1e-5,
               gemm_dtype=jnp.float32):
    y = lax.conv_general_dilated(
        x.astype(gemm_dtype), w.astype(gemm_dtype),
        window_strides=(stride, stride),
        padding=[(padding, padding), (padding, padding)],
        dimension_numbers=("NCHW", "OIHW", "NCHW"),
        preferred_element_type=jnp.float32)
    y = y + b[None, :, None, None]
    mean = y.mean(axis=(0, 2, 3), keepdims=True)
    var = ((y - mean) ** 2).mean(axis=(0, 2, 3), keepdims=True)
    return ((y - mean) * lax.rsqrt(var + eps)) * gamma[None, :, None, None] \
        + beta[None, :, None, None]


def _run_case(key, N, Cin, Cout, H, W, stride, padding, tile_override=None):
    k = jax.random.split(key, 5)
    x = jax.random.normal(k[0], (N, Cin, H, W), dtype=jnp.float32)
    w = jax.random.normal(k[1], (Cout, Cin, 3, 3), dtype=jnp.float32) * 0.1
    b = jax.random.normal(k[2], (Cout,), dtype=jnp.float32) * 0.1
    gamma = 1.0 + 0.1 * jax.random.normal(k[3], (Cout,), dtype=jnp.float32)
    beta = 0.1 * jax.random.normal(k[4], (Cout,), dtype=jnp.float32)

    out = jax.block_until_ready(
        conv_block(x, w, b, gamma, beta, stride=stride, padding=padding,
                   tile_override=tile_override))
    ref16 = _reference(x, w, b, gamma, beta, stride, padding,
                       gemm_dtype=jnp.bfloat16)    # mirrors the bf16 GEMM
    ref32 = _reference(x, w, b, gamma, beta, stride, padding,
                       gemm_dtype=jnp.float32)
    assert out.shape == ref32.shape, (out.shape, ref32.shape)
    err16 = float(jnp.max(jnp.abs(out - ref16)))
    err32 = float(jnp.max(jnp.abs(out - ref32)))
    assert err16 < 2e-3, f"bf16-matched reference mismatch: {err16}"
    assert err32 < 5e-2, f"f32 reference deviation too large: {err32}"


if __name__ == "__main__":
    key = jax.random.PRNGKey(0)
    k1, k2, k3, k4 = jax.random.split(key, 4)

    # 1) stride-1 fused path (first ConvBlock of the network, reduced width).
    _run_case(k1, N=2, Cin=3, Cout=16, H=16, W=16, stride=1, padding=1)
    # 2) stride-2 down-sampling ConvBlock -> im2col fallback path.
    _run_case(k2, N=2, Cin=16, Cout=32, H=16, W=16, stride=2, padding=1)
    # 3) stride-1 fused path, forced multi-tile: exercises the two-window
    #    concat, per-tile stats merge, tail trim and kernel-2 crop.
    _run_case(k3, N=2, Cin=4, Cout=8, H=16, W=16, stride=1, padding=1,
              tile_override=128)
    # 4) stride-2 fallback, forced multi-tile with a padded spatial tail.
    _run_case(k4, N=2, Cin=8, Cout=24, H=30, W=30, stride=2, padding=1,
              tile_override=128)

    print("KERNEL_OK")
</pallas_src>

<mosaic_0001>
module attributes {stable_mosaic.version = 11 : i64} {
  func.func @kernel(%arg0: i32, %arg1: i32, %arg2: i32, %arg3: memref<1x8x384xbf16, #tpu.memory_space<vmem>>, %arg4: memref<1x8x384xbf16, #tpu.memory_space<vmem>>, %arg5: memref<9x16x8xbf16, #tpu.memory_space<vmem>>, %arg6: memref<1x1x384xf32, #tpu.memory_space<vmem>>, %arg7: memref<1x16x384xf32, #tpu.memory_space<vmem>>, %arg8: memref<1x1x16x1xf32, #tpu.memory_space<vmem>>, %arg9: memref<1x1x16x1xf32, #tpu.memory_space<vmem>>) attributes {dimension_semantics = [#tpu.dimension_semantics<parallel>, #tpu.dimension_semantics<parallel>, #tpu.dimension_semantics<parallel>], iteration_bounds = array<i64: 2, 1, 1>, scalar_prefetch = 0 : i64, scratch_operands = 0 : i64, tpu.core_type = #tpu.core_type<tc>, window_params = [{transform_indices = @transform_0, window_bounds = array<i64: 1, 8, 384>}, {transform_indices = @transform_1, window_bounds = array<i64: 1, 8, 384>}, {transform_indices = @transform_2, window_bounds = array<i64: 9, 16, 8>}, {transform_indices = @transform_3, window_bounds = array<i64: 1, 1, 384>}, {transform_indices = @transform_4, window_bounds = array<i64: 1, 16, 384>}, {transform_indices = @transform_5, window_bounds = array<i64: 1, 1, 16, 1>}, {transform_indices = @transform_6, window_bounds = array<i64: 1, 1, 16, 1>}]} {
    %c0 = arith.constant 0 : index
    %c0_0 = arith.constant 0 : index
    %c0_1 = arith.constant 0 : index
    %0 = vector.load %arg3[%c0, %c0_0, %c0_1] : memref<1x8x384xbf16, #tpu.memory_space<vmem>>, vector<1x8x384xbf16>
    %1 = vector.shape_cast %0 : vector<1x8x384xbf16> to vector<8x384xbf16>
    %c0_2 = arith.constant 0 : index
    %c0_3 = arith.constant 0 : index
    %c0_4 = arith.constant 0 : index
    %2 = vector.load %arg4[%c0_2, %c0_3, %c0_4] : memref<1x8x384xbf16, #tpu.memory_space<vmem>>, vector<1x8x384xbf16>
    %3 = vector.shape_cast %2 : vector<1x8x384xbf16> to vector<8x384xbf16>
    %4 = tpu.concatenate %1, %3 in 1 : vector<8x384xbf16>, vector<8x384xbf16> -> vector<8x768xbf16>
    %c0_5 = arith.constant 0 : index
    %c0_6 = arith.constant 0 : index
    %c0_7 = arith.constant 0 : index
    %5 = vector.load %arg5[%c0_5, %c0_6, %c0_7] : memref<9x16x8xbf16, #tpu.memory_space<vmem>>, vector<1x16x8xbf16>
    %6 = vector.shape_cast %5 : vector<1x16x8xbf16> to vector<16x8xbf16>
    %7 = vector.extract_strided_slice %4 {offsets = [0, 0], sizes = [8, 384], strides = [1, 1]} : vector<8x768xbf16> to vector<8x384xbf16>
    %cst = arith.constant dense<0.000000e+00> : vector<16x384xf32>
    %8 = tpu.matmul %6, %7, %cst {dimension_numbers = #tpu.dot_dimension_numbers<[1], [0], [0], [1], [0, 0, 1, 1], [], []>} : vector<16x8xbf16>, vector<8x384xbf16>, vector<16x384xf32> -> vector<16x384xf32>
    %c1 = arith.constant 1 : index
    %c0_8 = arith.constant 0 : index
    %c0_9 = arith.constant 0 : index
    %9 = vector.load %arg5[%c1, %c0_8, %c0_9] : memref<9x16x8xbf16, #tpu.memory_space<vmem>>, vector<1x16x8xbf16>
    %10 = vector.shape_cast %9 : vector<1x16x8xbf16> to vector<16x8xbf16>
    %11 = vector.extract_strided_slice %4 {offsets = [0, 1], sizes = [8, 384], strides = [1, 1]} : vector<8x768xbf16> to vector<8x384xbf16>
    %cst_10 = arith.constant dense<0.000000e+00> : vector<16x384xf32>
    %12 = tpu.matmul %10, %11, %cst_10 {dimension_numbers = #tpu.dot_dimension_numbers<[1], [0], [0], [1], [0, 0, 1, 1], [], []>} : vector<16x8xbf16>, vector<8x384xbf16>, vector<16x384xf32> -> vector<16x384xf32>
    %13 = arith.addf %8, %12 : vector<16x384xf32>
    %c2 = arith.constant 2 : index
    %c0_11 = arith.constant 0 : index
    %c0_12 = arith.constant 0 : index
    %14 = vector.load %arg5[%c2, %c0_11, %c0_12] : memref<9x16x8xbf16, #tpu.memory_space<vmem>>, vector<1x16x8xbf16>
    %15 = vector.shape_cast %14 : vector<1x16x8xbf16> to vector<16x8xbf16>
    %16 = vector.extract_strided_slice %4 {offsets = [0, 2], sizes = [8, 384], strides = [1, 1]} : vector<8x768xbf16> to vector<8x384xbf16>
    %cst_13 = arith.constant dense<0.000000e+00> : vector<16x384xf32>
    %17 = tpu.matmul %15, %16, %cst_13 {dimension_numbers = #tpu.dot_dimension_numbers<[1], [0], [0], [1], [0, 0, 1, 1], [], []>} : vector<16x8xbf16>, vector<8x384xbf16>, vector<16x384xf32> -> vector<16x384xf32>
    %18 = arith.addf %13, %17 : vector<16x384xf32>
    %c3 = arith.constant 3 : index
    %c0_14 = arith.constant 0 : index
    %c0_15 = arith.constant 0 : index
    %19 = vector.load %arg5[%c3, %c0_14, %c0_15] : memref<9x16x8xbf16, #tpu.memory_space<vmem>>, vector<1x16x8xbf16>
    %20 = vector.shape_cast %19 : vector<1x16x8xbf16> to vector<16x8xbf16>
    %21 = vector.extract_strided_slice %4 {offsets = [0, 18], sizes = [8, 384], strides = [1, 1]} : vector<8x768xbf16> to vector<8x384xbf16>
    %cst_16 = arith.constant dense<0.000000e+00> : vector<16x384xf32>
    %22 = tpu.matmul %20, %21, %cst_16 {dimension_numbers = #tpu.dot_dimension_numbers<[1], [0], [0], [1], [0, 0, 1, 1], [], []>} : vector<16x8xbf16>, vector<8x384xbf16>, vector<16x384xf32> -> vector<16x384xf32>
    %23 = arith.addf %18, %22 : vector<16x384xf32>
    %c4 = arith.constant 4 : index
    %c0_17 = arith.constant 0 : index
    %c0_18 = arith.constant 0 : index
    %24 = vector.load %arg5[%c4, %c0_17, %c0_18] : memref<9x16x8xbf16, #tpu.memory_space<vmem>>, vector<1x16x8xbf16>
    %25 = vector.shape_cast %24 : vector<1x16x8xbf16> to vector<16x8xbf16>
    %26 = vector.extract_strided_slice %4 {offsets = [0, 19], sizes = [8, 384], strides = [1, 1]} : vector<8x768xbf16> to vector<8x384xbf16>
    %cst_19 = arith.constant dense<0.000000e+00> : vector<16x384xf32>
    %27 = tpu.matmul %25, %26, %cst_19 {dimension_numbers = #tpu.dot_dimension_numbers<[1], [0], [0], [1], [0, 0, 1, 1], [], []>} : vector<16x8xbf16>, vector<8x384xbf16>, vector<16x384xf32> -> vector<16x384xf32>
    %28 = arith.addf %23, %27 : vector<16x384xf32>
    %c5 = arith.constant 5 : index
    %c0_20 = arith.constant 0 : index
    %c0_21 = arith.constant 0 : index
    %29 = vector.load %arg5[%c5, %c0_20, %c0_21] : memref<9x16x8xbf16, #tpu.memory_space<vmem>>, vector<1x16x8xbf16>
    %30 = vector.shape_cast %29 : vector<1x16x8xbf16> to vector<16x8xbf16>
    %31 = vector.extract_strided_slice %4 {offsets = [0, 20], sizes = [8, 384], strides = [1, 1]} : vector<8x768xbf16> to vector<8x384xbf16>
    %cst_22 = arith.constant dense<0.000000e+00> : vector<16x384xf32>
    %32 = tpu.matmul %30, %31, %cst_22 {dimension_numbers = #tpu.dot_dimension_numbers<[1], [0], [0], [1], [0, 0, 1, 1], [], []>} : vector<16x8xbf16>, vector<8x384xbf16>, vector<16x384xf32> -> vector<16x384xf32>
    %33 = arith.addf %28, %32 : vector<16x384xf32>
    %c6 = arith.constant 6 : index
    %c0_23 = arith.constant 0 : index
    %c0_24 = arith.constant 0 : index
    %34 = vector.load %arg5[%c6, %c0_23, %c0_24] : memref<9x16x8xbf16, #tpu.memory_space<vmem>>, vector<1x16x8xbf16>
    %35 = vector.shape_cast %34 : vector<1x16x8xbf16> to vector<16x8xbf16>
    %36 = vector.extract_strided_slice %4 {offsets = [0, 36], sizes = [8, 384], strides = [1, 1]} : vector<8x768xbf16> to vector<8x384xbf16>
    %cst_25 = arith.constant dense<0.000000e+00> : vector<16x384xf32>
    %37 = tpu.matmul %35, %36, %cst_25 {dimension_numbers = #tpu.dot_dimension_numbers<[1], [0], [0], [1], [0, 0, 1, 1], [], []>} : vector<16x8xbf16>, vector<8x384xbf16>, vector<16x384xf32> -> vector<16x384xf32>
    %38 = arith.addf %33, %37 : vector<16x384xf32>
    %c7 = arith.constant 7 : index
    %c0_26 = arith.constant 0 : index
    %c0_27 = arith.constant 0 : index
    %39 = vector.load %arg5[%c7, %c0_26, %c0_27] : memref<9x16x8xbf16, #tpu.memory_space<vmem>>, vector<1x16x8xbf16>
    %40 = vector.shape_cast %39 : vector<1x16x8xbf16> to vector<16x8xbf16>
    %41 = vector.extract_strided_slice %4 {offsets = [0, 37], sizes = [8, 384], strides = [1, 1]} : vector<8x768xbf16> to vector<8x384xbf16>
    %cst_28 = arith.constant dense<0.000000e+00> : vector<16x384xf32>
    %42 = tpu.matmul %40, %41, %cst_28 {dimension_numbers = #tpu.dot_dimension_numbers<[1], [0], [0], [1], [0, 0, 1, 1], [], []>} : vector<16x8xbf16>, vector<8x384xbf16>, vector<16x384xf32> -> vector<16x384xf32>
    %43 = arith.addf %38, %42 : vector<16x384xf32>
    %c8 = arith.constant 8 : index
    %c0_29 = arith.constant 0 : index
    %c0_30 = arith.constant 0 : index
    %44 = vector.load %arg5[%c8, %c0_29, %c0_30] : memref<9x16x8xbf16, #tpu.memory_space<vmem>>, vector<1x16x8xbf16>
    %45 = vector.shape_cast %44 : vector<1x16x8xbf16> to vector<16x8xbf16>
    %46 = vector.extract_strided_slice %4 {offsets = [0, 38], sizes = [8, 384], strides = [1, 1]} : vector<8x768xbf16> to vector<8x384xbf16>
    %cst_31 = arith.constant dense<0.000000e+00> : vector<16x384xf32>
    %47 = tpu.matmul %45, %46, %cst_31 {dimension_numbers = #tpu.dot_dimension_numbers<[1], [0], [0], [1], [0, 0, 1, 1], [], []>} : vector<16x8xbf16>, vector<8x384xbf16>, vector<16x384xf32> -> vector<16x384xf32>
    %48 = arith.addf %43, %47 : vector<16x384xf32>
    %c0_32 = arith.constant 0 : index
    %c0_33 = arith.constant 0 : index
    %c0_34 = arith.constant 0 : index
    %49 = vector.load %arg7[%c0_32, %c0_33, %c0_34] : memref<1x16x384xf32, #tpu.memory_space<vmem>>, vector<1x16x384xf32>
    %50 = vector.shape_cast %49 : vector<1x16x384xf32> to vector<16x384xf32>
    %51 = vector.shape_cast %48 : vector<16x384xf32> to vector<1x16x384xf32>
    tpu.vector_store %arg7[%c0_32, %c0_33, %c0_34], %51 {strides = array<i32>} : memref<1x16x384xf32, #tpu.memory_space<vmem>>, vector<1x16x384xf32>,
    %c0_35 = arith.constant 0 : index
    %c0_36 = arith.constant 0 : index
    %c0_37 = arith.constant 0 : index
    %52 = vector.load %arg6[%c0_35, %c0_36, %c0_37] : memref<1x1x384xf32, #tpu.memory_space<vmem>>, vector<1x1x384xf32>
    %53 = vector.shape_cast %52 : vector<1x1x384xf32> to vector<1x384xf32>
    %54 = vector.shape_cast %53 : vector<1x384xf32> to vector<1x1x384xf32>
    %cst_38 = arith.constant dense<0.000000e+00> : vector<1xf32>
    %55 = vector.multi_reduction <add>, %54, %cst_38 [1, 2] : vector<1x1x384xf32> to vector<1xf32>
    %56 = vector.shape_cast %55 : vector<1xf32> to vector<1x1x1xf32>
    %57 = vector.extract %56[0, 0, 0] : f32 from vector<1x1x1xf32>
    %cst_39 = arith.constant 1.000000e+00 : f32
    %58 = arith.maximumf %57, %cst_39 : f32
    %59 = vector.broadcast %53 : vector<1x384xf32> to vector<16x384xf32>
    %60 = arith.mulf %48, %59 : vector<16x384xf32>
    %cst_40 = arith.constant dense<0.000000e+00> : vector<16xf32>
    %61 = vector.multi_reduction <add>, %60, %cst_40 [1] : vector<16x384xf32> to vector<16xf32>
    %62 = vector.shape_cast %61 : vector<16xf32> to vector<16x1xf32>
    %63 = vector.broadcast %58 : f32 to vector<16x1xf32>
    %64 = arith.divf %62, %63 : vector<16x1xf32>
    %65 = vector.broadcast %64 : vector<16x1xf32> to vector<16x384xf32>
    %66 = arith.subf %48, %65 : vector<16x384xf32>
    %67 = vector.broadcast %53 : vector<1x384xf32> to vector<16x384xf32>
    %68 = arith.mulf %66, %67 : vector<16x384xf32>
    %69 = arith.mulf %68, %68 : vector<16x384xf32>
    %cst_41 = arith.constant dense<0.000000e+00> : vector<16xf32>
    %70 = vector.multi_reduction <add>, %69, %cst_41 [1] : vector<16x384xf32> to vector<16xf32>
    %71 = vector.shape_cast %70 : vector<16xf32> to vector<16x1xf32>
    %c0_42 = arith.constant 0 : index
    %c0_43 = arith.constant 0 : index
    %c0_44 = arith.constant 0 : index
    %c0_45 = arith.constant 0 : index
    %72 = vector.load %arg8[%c0_42, %c0_43, %c0_44, %c0_45] : memref<1x1x16x1xf32, #tpu.memory_space<vmem>>, vector<1x1x16x1xf32>
    %73 = vector.shape_cast %72 : vector<1x1x16x1xf32> to vector<16x1xf32>
    %74 = vector.shape_cast %62 : vector<16x1xf32> to vector<1x1x16x1xf32>
    tpu.vector_store %arg8[%c0_42, %c0_43, %c0_44, %c0_45], %74 {strides = array<i32>} : memref<1x1x16x1xf32, #tpu.memory_space<vmem>>, vector<1x1x16x1xf32>,
    %c0_46 = arith.constant 0 : index
    %c0_47 = arith.constant 0 : index
    %c0_48 = arith.constant 0 : index
    %c0_49 = arith.constant 0 : index
    %75 = vector.load %arg9[%c0_46, %c0_47, %c0_48, %c0_49] : memref<1x1x16x1xf32, #tpu.memory_space<vmem>>, vector<1x1x16x1xf32>
    %76 = vector.shape_cast %75 : vector<1x1x16x1xf32> to vector<16x1xf32>
    %77 = vector.shape_cast %71 : vector<16x1xf32> to vector<1x1x16x1xf32>
    tpu.vector_store %arg9[%c0_46, %c0_47, %c0_48, %c0_49], %77 {strides = array<i32>} : memref<1x1x16x1xf32, #tpu.memory_space<vmem>>, vector<1x1x16x1xf32>,
    return
  }
  func.func @transform_0(%arg0: i32, %arg1: i32, %arg2: i32) -> (i32, i32, i32) {
    %c0_i32 = arith.constant 0 : i32
    %0 = arith.addi %arg2, %c0_i32 : i32
    %c0_i32_0 = arith.constant 0 : i32
    %c0_i32_1 = arith.constant 0 : i32
    return %arg0, %c0_i32_0, %0 : i32, i32, i32
  }
  func.func @transform_1(%arg0: i32, %arg1: i32, %arg2: i32) -> (i32, i32, i32) {
    %c1_i32 = arith.constant 1 : i32
    %0 = arith.addi %arg2, %c1_i32 : i32
    %c0_i32 = arith.constant 0 : i32
    %c0_i32_0 = arith.constant 0 : i32
    return %arg0, %c0_i32, %0 : i32, i32, i32
  }
  func.func @transform_2(%arg0: i32, %arg1: i32, %arg2: i32) -> (i32, i32, i32) {
    %c0_i32 = arith.constant 0 : i32
    %c0_i32_0 = arith.constant 0 : i32
    %c0_i32_1 = arith.constant 0 : i32
    return %c0_i32, %arg1, %c0_i32_0 : i32, i32, i32
  }
  func.func @transform_3(%arg0: i32, %arg1: i32, %arg2: i32) -> (i32, i32, i32) {
    %c0_i32 = arith.constant 0 : i32
    %c0_i32_0 = arith.constant 0 : i32
    %c0_i32_1 = arith.constant 0 : i32
    return %arg2, %c0_i32, %c0_i32_0 : i32, i32, i32
  }
  func.func @transform_4(%arg0: i32, %arg1: i32, %arg2: i32) -> (i32, i32, i32) {
    %c0_i32 = arith.constant 0 : i32
    return %arg0, %arg1, %arg2 : i32, i32, i32
  }
  func.func @transform_5(%arg0: i32, %arg1: i32, %arg2: i32) -> (i32, i32, i32, i32) {
    %c0_i32 = arith.constant 0 : i32
    %c0_i32_0 = arith.constant 0 : i32
    return %arg0, %arg2, %arg1, %c0_i32 : i32, i32, i32, i32
  }
  func.func @transform_6(%arg0: i32, %arg1: i32, %arg2: i32) -> (i32, i32, i32, i32) {
    %c0_i32 = arith.constant 0 : i32
    %c0_i32_0 = arith.constant 0 : i32
    return %arg0, %arg2, %arg1, %c0_i32 : i32, i32, i32, i32
  }
}

module attributes {stable_mosaic.version = 11 : i64} {
  func.func @_bn_apply_kernel(%arg0: i32, %arg1: i32, %arg2: memref<1x16x18x18xf32, #tpu.memory_space<vmem>>, %arg3: memref<16x1x1xf32, #tpu.memory_space<vmem>>, %arg4: memref<16x1x1xf32, #tpu.memory_space<vmem>>, %arg5: memref<1x16x16x16xf32, #tpu.memory_space<vmem>>) attributes {dimension_semantics = [#tpu.dimension_semantics<parallel>, #tpu.dimension_semantics<parallel>], iteration_bounds = array<i64: 2, 1>, scalar_prefetch = 0 : i64, scratch_operands = 0 : i64, tpu.core_type = #tpu.core_type<tc>, window_params = [{transform_indices = @transform_0, window_bounds = array<i64: 1, 16, 18, 18>}, {transform_indices = @transform_1, window_bounds = array<i64: 16, 1, 1>}, {transform_indices = @transform_2, window_bounds = array<i64: 16, 1, 1>}, {transform_indices = @transform_3, window_bounds = array<i64: 1, 16, 16, 16>}]} {
    %c0 = arith.constant 0 : index
    %c0_0 = arith.constant 0 : index
    %c0_1 = arith.constant 0 : index
    %c0_2 = arith.constant 0 : index
    %0 = vector.load %arg2[%c0, %c0_0, %c0_1, %c0_2] : memref<1x16x18x18xf32, #tpu.memory_space<vmem>>, vector<1x16x18x18xf32>
    %1 = vector.shape_cast %0 : vector<1x16x18x18xf32> to vector<16x18x18xf32>
    %2 = vector.extract_strided_slice %1 {offsets = [0, 0, 0], sizes = [16, 16, 16], strides = [1, 1, 1]} : vector<16x18x18xf32> to vector<16x16x16xf32>
    %c0_3 = arith.constant 0 : index
    %c0_4 = arith.constant 0 : index
    %c0_5 = arith.constant 0 : index
    %3 = vector.load %arg3[%c0_3, %c0_4, %c0_5] : memref<16x1x1xf32, #tpu.memory_space<vmem>>, vector<16x1x1xf32>
    %4 = vector.broadcast %3 : vector<16x1x1xf32> to vector<16x16x16xf32>
    %5 = arith.mulf %2, %4 : vector<16x16x16xf32>
    %c0_6 = arith.constant 0 : index
    %c0_7 = arith.constant 0 : index
    %c0_8 = arith.constant 0 : index
    %6 = vector.load %arg4[%c0_6, %c0_7, %c0_8] : memref<16x1x1xf32, #tpu.memory_space<vmem>>, vector<16x1x1xf32>
    %7 = vector.broadcast %6 : vector<16x1x1xf32> to vector<16x16x16xf32>
    %8 = arith.addf %5, %7 : vector<16x16x16xf32>
    %c0_9 = arith.constant 0 : index
    %c0_10 = arith.constant 0 : index
    %c0_11 = arith.constant 0 : index
    %c0_12 = arith.constant 0 : index
    %9 = vector.load %arg5[%c0_9, %c0_10, %c0_11, %c0_12] : memref<1x16x16x16xf32, #tpu.memory_space<vmem>>, vector<1x16x16x16xf32>
    %10 = vector.shape_cast %9 : vector<1x16x16x16xf32> to vector<16x16x16xf32>
    %11 = vector.shape_cast %8 : vector<16x16x16xf32> to vector<1x16x16x16xf32>
    tpu.vector_store %arg5[%c0_9, %c0_10, %c0_11, %c0_12], %11 {strides = array<i32>} : memref<1x16x16x16xf32, #tpu.memory_space<vmem>>, vector<1x16x16x16xf32>,
    return
  }
  func.func @transform_0(%arg0: i32, %arg1: i32) -> (i32, i32, i32, i32) {
    %c0_i32 = arith.constant 0 : i32
    %c0_i32_0 = arith.constant 0 : i32
    %c0_i32_1 = arith.constant 0 : i32
    return %arg0, %arg1, %c0_i32, %c0_i32_0 : i32, i32, i32, i32
  }
  func.func @transform_1(%arg0: i32, %arg1: i32) -> (i32, i32, i32) {
    %c0_i32 = arith.constant 0 : i32
    %c0_i32_0 = arith.constant 0 : i32
    %c0_i32_1 = arith.constant 0 : i32
    return %arg1, %c0_i32, %c0_i32_0 : i32, i32, i32
  }
  func.func @transform_2(%arg0: i32, %arg1: i32) -> (i32, i32, i32) {
    %c0_i32 = arith.constant 0 : i32
    %c0_i32_0 = arith.constant 0 : i32
    %c0_i32_1 = arith.constant 0 : i32
    return %arg1, %c0_i32, %c0_i32_0 : i32, i32, i32
  }
  func.func @transform_3(%arg0: i32, %arg1: i32) -> (i32, i32, i32, i32) {
    %c0_i32 = arith.constant 0 : i32
    %c0_i32_0 = arith.constant 0 : i32
    %c0_i32_1 = arith.constant 0 : i32
    return %arg0, %arg1, %c0_i32, %c0_i32_0 : i32, i32, i32, i32
  }
}

</mosaic_0001>

<llo_original>
// kernel: conv_block.3
$region0: #{conv_block.3}
  #allocation0 [shape = 'u32[]', space=smem, size = 0x4, offset = 0x4, fixed_abs, tag = 'smem constant byte address 0x4 - core index']
  #allocation1 [shape = 'u32[144,128]{1,0:T(1,128)}', space=vmem, size = 0x12000, scoped, tag = 'internal scratch']
  %s0 = inlined_call_operand.vmem [shape: f32[2,16,18,18], index: 0, kind: input, shape index: {}]
  %s1 = inlined_call_operand.vmem [shape: f32[16,1,1], index: 1, kind: input, shape index: {}]
  %s2 = inlined_call_operand.vmem [shape: f32[16,1,1], index: 2, kind: input, shape index: {}]
  %s3 = inlined_call_operand.hbm [shape: f32[2,16,16,16], index: 3, kind: output, shape index: {}]
  %s4 = sld [smem:[#allocation0]]
  $region45: #{conv_block.3} parent=0
    _
  %s6 = ssub.s32 1, %s4
  %s7 = scalar_select 0, %s6, %s4
  $region1: #{conv_block.3} parent=0
    #allocation2 [shape = 'u8[262144]{0}', space=vmem, size = 0x40000, scoped, tag = 'output window, operand 0']
    #allocation3 [shape = 's32[2]{0}', space=sflag, size = 0x8, scoped, tag = 'scoped memory for conv_block.3']
    %8 = vsyncpa [#allocation3], 0
    %s9 = scalar_lea.sflag [#allocation3], 1
    %10 = vsyncpa %s9, 0
    loop: start=0, step=1, limit=4
    $region2: #{conv_block.3} parent=1 // loop_pre_header
      _
    $region3: #{conv_block.3} parent=1 // loop_header
      %s12 = sphi 0, %s16
      %p13 = scmp.ge.s32.totalorder %s12, 4
      %s19 = sphi 0, %s31
      %s20 = sphi 0, %s27
      %s21 = sphi 0, %s19
      %s22 = sphi 0, %s20
      %s23 = sphi 0, %s21
      %s24 = sphi 0, %s22
      %s36 = sphi 0, %s38
      %s39 = sphi 0, %s36
      %s40 = sphi 0, %s39
      %s56 = sphi 0, %s40
      %s62 = sphi 0, %s64
      %s65 = sphi 0, %s62
      %s66 = sphi 0, %s65
      %s82 = sphi 0, %s66
      %s88 = sphi 0, %s90
      %s91 = sphi 0, %s88
      %s92 = sphi 0, %s91
      %s108 = sphi 0, %s92
      %s116 = sphi 0, %s118
      %s119 = sphi 0, %s116
      %s120 = sphi 0, %s119
      %s136 = sphi 0, %s120
    $region4: #{conv_block.3} parent=1 // loop_header_branch
      %15 = sbr.rel (%p13) target = $region8
    $region5: #{conv_block.3} parent=1 // loop_body
      %s17 = ssub.s32 %s12, 1
      %s18 = ssub.s32 %s12, 2
      %s25 = sadd.s32 1, %s20
      %p26 = scmp.ge.s32.totalorder %s25, 1
      %s27 = scalar_select %p26, 0, %s25
      %s28 = sadd.s32 1, %s19
      %s29 = scalar_select %p26, %s28, %s19
      %p30 = scmp.ge.s32.totalorder %s29, 2
      %s31 = scalar_select %p30, 0, %s29
      %s32 = ssub.s32 %s19, %s31
      %s33 = ssub.s32 %s20, %s27
      %s34 = sor.u32 %s32, %s33
      %p35 = scmp.eq.s32.totalorder %s34, 0
      %s37 = sadd.s32 %s36, 1
      %s38 = scalar_select %p35, %s36, %s37
      %p41 = pneg %p35
      %p42 = scmp.eq.s32.totalorder %s12, 1
      %p43 = por %p41, %p42
      %p44 = scmp.ne.s32.totalorder %s36, %s39
      %p45 = scmp.eq.s32.totalorder %s12, 0
      %p46 = por %p44, %p45
      %p47 = scmp.ne.s32.totalorder %s36, %s39
      %p48 = scmp.eq.s32.totalorder %s17, 1
      %p49 = por %p47, %p48
      %p50 = scmp.ne.s32.totalorder %s39, %s40
      %p51 = scmp.eq.s32.totalorder %s17, 0
      %p52 = por %p50, %p51
      %p53 = scmp.ne.s32.totalorder %s39, %s40
      %p54 = scmp.eq.s32.totalorder %s18, 1
      %p55 = por %p53, %p54
      %p57 = scmp.ne.s32.totalorder %s40, %s56
      %p58 = scmp.eq.s32.totalorder %s18, 0
      %p59 = por %p57, %p58
      %s60 = ssub.s32 %s20, %s27
      %p61 = scmp.eq.s32.totalorder %s60, 0
      %s63 = sadd.s32 %s62, 1
      %s64 = scalar_select %p61, %s62, %s63
      %p67 = pneg %p61
      %p68 = scmp.eq.s32.totalorder %s12, 1
      %p69 = por %p67, %p68
      %p70 = scmp.ne.s32.totalorder %s62, %s65
      %p71 = scmp.eq.s32.totalorder %s12, 0
      %p72 = por %p70, %p71
      %p73 = scmp.ne.s32.totalorder %s62, %s65
      %p74 = scmp.eq.s32.totalorder %s17, 1
      %p75 = por %p73, %p74
      %p76 = scmp.ne.s32.totalorder %s65, %s66
      %p77 = scmp.eq.s32.totalorder %s17, 0
      %p78 = por %p76, %p77
      %p79 = scmp.ne.s32.totalorder %s65, %s66
      %p80 = scmp.eq.s32.totalorder %s18, 1
      %p81 = por %p79, %p80
      %p83 = scmp.ne.s32.totalorder %s66, %s82
      %p84 = scmp.eq.s32.totalorder %s18, 0
      %p85 = por %p83, %p84
      %s86 = ssub.s32 %s20, %s27
      %p87 = scmp.eq.s32.totalorder %s86, 0
      %s89 = sadd.s32 %s88, 1
      %s90 = scalar_select %p87, %s88, %s89
      %p93 = pneg %p87
      %p94 = scmp.eq.s32.totalorder %s12, 1
      %p95 = por %p93, %p94
      %p96 = scmp.ne.s32.totalorder %s88, %s91
      %p97 = scmp.eq.s32.totalorder %s12, 0
      %p98 = por %p96, %p97
      %p99 = scmp.ne.s32.totalorder %s88, %s91
      %p100 = scmp.eq.s32.totalorder %s17, 1
      %p101 = por %p99, %p100
      %p102 = scmp.ne.s32.totalorder %s91, %s92
      %p103 = scmp.eq.s32.totalorder %s17, 0
      %p104 = por %p102, %p103
      %p105 = scmp.ne.s32.totalorder %s91, %s92
      %p106 = scmp.eq.s32.totalorder %s18, 1
      %p107 = por %p105, %p106
      %p109 = scmp.ne.s32.totalorder %s92, %s108
      %p110 = scmp.eq.s32.totalorder %s18, 0
      %p111 = por %p109, %p110
      %s112 = ssub.s32 %s19, %s31
      %s113 = ssub.s32 %s20, %s27
      %s114 = sor.u32 %s112, %s113
      %p115 = scmp.eq.s32.totalorder %s114, 0
      %s117 = sadd.s32 %s116, 1
      %s118 = scalar_select %p115, %s116, %s117
      %p121 = pneg %p115
      %p122 = scmp.eq.s32.totalorder %s12, 1
      %p123 = por %p121, %p122
      %p124 = scmp.ne.s32.totalorder %s116, %s119
      %p125 = scmp.eq.s32.totalorder %s12, 0
      %p126 = por %p124, %p125
      %p127 = scmp.ne.s32.totalorder %s116, %s119
      %p128 = scmp.eq.s32.totalorder %s17, 1
      %p129 = por %p127, %p128
      %p130 = scmp.ne.s32.totalorder %s119, %s120
      %p131 = scmp.eq.s32.totalorder %s17, 0
      %p132 = por %p130, %p131
      %p133 = scmp.ne.s32.totalorder %s119, %s120
      %p134 = scmp.eq.s32.totalorder %s18, 1
      %p135 = por %p133, %p134
      %p137 = scmp.ne.s32.totalorder %s120, %s136
      %p138 = scmp.eq.s32.totalorder %s18, 0
      %p139 = por %p137, %p138
      %p140 = scmp.le.s32.totalorder 1, %s12
      %p141 = scmp.lt.s32.totalorder %s12, 3
      %p142 = pnand %p140, %p141
      %p143 = pneg %p142
      // Predicated region
      $region9: #{conv_block.3} parent=5 // pred_check
        _
      $region10: #{conv_block.3} parent=5 // pred_check_branch
        %145 = sbr.rel (%p142) target = $region12
      $region11: #{conv_block.3} parent=5 // pred_region
        %s146 = ssub.s32 %s12, 1
        // Predicated region
        $region13: #{conv_block.3} parent=11 // pred_check
          %p147 = pneg %p78
        $region14: #{conv_block.3} parent=11 // pred_check_branch
          %149 = sbr.rel (%p147) target = $region16
        $region15: #{conv_block.3} parent=11 // pred_region
          %s150 = smul.u32 16, %s22
          %p151 = scmp.lt.s32.totalorder %s150, 15
          %s152 = scalar_select %p151, %s150, 15
          %s153 = scalar_lea.vmem %s1, %s152
          %s154 = smul.u32 16, %s22
        $region16: #{conv_block.3} parent=11 // pred_fallthru
          _
        // Predicated region
        $region17: #{conv_block.3} parent=11 // pred_check
          %p155 = pneg %p104
        $region18: #{conv_block.3} parent=11 // pred_check_branch
          %157 = sbr.rel (%p155) target = $region20
        $region19: #{conv_block.3} parent=11 // pred_region
          %s158 = smul.u32 16, %s22
          %p159 = scmp.lt.s32.totalorder %s158, 15
          %s160 = scalar_select %p159, %s158, 15
          %s161 = scalar_lea.vmem %s2, %s160
          %s162 = smul.u32 16, %s22
        $region20: #{conv_block.3} parent=11 // pred_fallthru
          _
      $region12: #{conv_block.3} parent=5 // pred_fallthru
        _
      %p163 = scmp.lt.s32.totalorder %s12, 2
      // Predicated region
      $region21: #{conv_block.3} parent=5 // pred_check
        %p164 = pneg %p163
      $region22: #{conv_block.3} parent=5 // pred_check_branch
        %166 = sbr.rel (%p164) target = $region24
      $region23: #{conv_block.3} parent=5 // pred_region
        // Predicated region
        $region25: #{conv_block.3} parent=23 // pred_check
          %p167 = pneg %p46
        $region26: #{conv_block.3} parent=23 // pred_check_branch
          %169 = sbr.rel (%p167) target = $region28
        $region27: #{conv_block.3} parent=23 // pred_region
          %s170 = smul.u32 16, %s20
          %p171 = scmp.lt.s32.totalorder %s19, 1
          %s172 = scalar_select %p171, %s19, 1
          %p173 = scmp.lt.s32.totalorder %s170, 15
          %s174 = scalar_select %p173, %s170, 15
          %s175 = smul.addr %s174, 3
          %s176 = smul.addr %s172, 48
          %s177 = sadd.s32 %s175, %s176
          %s178 = smul.addr %s177, 8
          %s179 = scalar_lea.vmem %s0, %s178
          %s180 = smul.u32 16, %s20
        $region28: #{conv_block.3} parent=23 // pred_fallthru
          _
      $region24: #{conv_block.3} parent=5 // pred_fallthru
        _
      %p181 = scmp.le.s32.totalorder 1, %s12
      %p182 = scmp.lt.s32.totalorder %s12, 3
      %p183 = pnand %p181, %p182
      %p184 = pneg %p183
      // Predicated region
      $region29: #{conv_block.3} parent=5 // pred_check
        _
      $region30: #{conv_block.3} parent=5 // pred_check_branch
        %186 = sbr.rel (%p183) target = $region32
      $region31: #{conv_block.3} parent=5 // pred_region
        %s187 = ssub.s32 %s12, 1
        %s188 = smul.u32 16, %s22
        %p189 = scmp.lt.s32.totalorder %s21, 1
        %s190 = scalar_select %p189, %s21, 1
        %p191 = scmp.lt.s32.totalorder %s188, 15
        %s192 = scalar_select %p191, %s188, 15
        %s193 = smul.addr %s192, 3
        %s194 = smul.addr %s190, 48
        %s195 = sadd.s32 %s193, %s194
        %s196 = smul.addr %s195, 8
        %s197 = scalar_lea.vmem %s0, %s196
        %p198 = pneg %p52
        %p199 = pneg %p49
        %s200 = smul.u32 16, %s22
        %p201 = scmp.lt.s32.totalorder %s200, 15
        %s202 = scalar_select %p201, %s200, 15
        %s203 = scalar_lea.vmem %s1, %s202
        %p204 = pneg %p78
        %p205 = pneg %p75
        %s206 = smul.u32 16, %s22
        %p207 = scmp.lt.s32.totalorder %s206, 15
        %s208 = scalar_select %p207, %s206, 15
        %s209 = scalar_lea.vmem %s2, %s208
        %p210 = pneg %p104
        %p211 = pneg %p101
        %p212 = pneg %p132
        %p213 = pneg %p129
        %s214 = sand.u32 %s119, 1
        %s215 = scalar_lea.sflag [#allocation3], %s214
        %s216 = sand.u32 %s119, 1
        %s217 = smul.addr %s216, 256
        %s218 = scalar_lea.vmem [#allocation2], %s217
        %s219 = smul.u32 16, %s22
        %p220 = scmp.lt.s32.totalorder %s21, 1
        %s221 = scalar_select %p220, %s21, 1
        %p222 = scmp.lt.s32.totalorder %s219, 15
        %s223 = scalar_select %p222, %s219, 15
        %s224 = smul.addr %s223, 3
        %s225 = smul.addr %s221, 48
        %s226 = sadd.s32 %s224, %s225
        %s227 = smul.addr %s226, 8
        %s228 = scalar_lea.vmem %s0, %s227
        %s229 = smul.u32 16, %s22
        %s230 = smul.u32 16, %s22
        %p231 = scmp.lt.s32.totalorder %s230, 15
        %s232 = scalar_select %p231, %s230, 15
        %s233 = scalar_lea.vmem %s1, %s232
        %s234 = smul.u32 16, %s22
        %s235 = smul.u32 16, %s22
        %p236 = scmp.lt.s32.totalorder %s235, 15
        %s237 = scalar_select %p236, %s235, 15
        %s238 = scalar_lea.vmem %s2, %s237
        %s239 = smul.u32 16, %s22
        %s240 = smul.u32 16, %s22
        %v241 = vld [vmem:[%s228] sm:$0xff]
        %v242 = vld [vmem:[%s228 + $0x8] sm:$0xff]
        %v243 = vld [vmem:[%s228 + $0x18] sm:$0xff]
        %v244 = vld [vmem:[%s228 + $0x20] sm:$0xff]
        %v245 = vld [vmem:[%s228 + $0x30] sm:$0xff]
        %v246 = vld [vmem:[%s228 + $0x38] sm:$0xff]
        %v247 = vld [vmem:[%s228 + $0x48] sm:$0xff]
        %v248 = vld [vmem:[%s228 + $0x50] sm:$0xff]
        %v249 = vld [vmem:[%s228 + $0x60] sm:$0xff]
        %v250 = vld [vmem:[%s228 + $0x68] sm:$0xff]
        %v251 = vld [vmem:[%s228 + $0x78] sm:$0xff]
        %v252 = vld [vmem:[%s228 + $0x80] sm:$0xff]
        %v253 = vld [vmem:[%s228 + $0x90] sm:$0xff]
        %v254 = vld [vmem:[%s228 + $0x98] sm:$0xff]
        %v255 = vld [vmem:[%s228 + $0xa8] sm:$0xff]
        %v256 = vld [vmem:[%s228 + $0xb0] sm:$0xff]
        %v257 = vld [vmem:[%s228 + $0xc0] sm:$0xff]
        %v258 = vld [vmem:[%s228 + $0xc8] sm:$0xff]
        %v259 = vld [vmem:[%s228 + $0xd8] sm:$0xff]
        %v260 = vld [vmem:[%s228 + $0xe0] sm:$0xff]
        %v261 = vld [vmem:[%s228 + $0xf0] sm:$0xff]
        %v262 = vld [vmem:[%s228 + $0xf8] sm:$0xff]
        %v263 = vld [vmem:[%s228 + $0x108] sm:$0xff]
        %v264 = vld [vmem:[%s228 + $0x110] sm:$0xff]
        %v265 = vld [vmem:[%s228 + $0x120] sm:$0xff]
        %v266 = vld [vmem:[%s228 + $0x128] sm:$0xff]
        %v267 = vld [vmem:[%s228 + $0x138] sm:$0xff]
        %v268 = vld [vmem:[%s228 + $0x140] sm:$0xff]
        %v269 = vld [vmem:[%s228 + $0x150] sm:$0xff]
        %v270 = vld [vmem:[%s228 + $0x158] sm:$0xff]
        %v271 = vld [vmem:[%s228 + $0x168] sm:$0xff]
        %v272 = vld [vmem:[%s228 + $0x170] sm:$0xff]
        %v273 = vld [vmem:[%s233] sm:$0x1]
        %v274 = vld [vmem:[%s233 + $0x1] sm:$0x1]
        %v275 = vld [vmem:[%s233 + $0x2] sm:$0x1]
        %v276 = vld [vmem:[%s233 + $0x3] sm:$0x1]
        %v277 = vld [vmem:[%s233 + $0x4] sm:$0x1]
        %v278 = vld [vmem:[%s233 + $0x5] sm:$0x1]
        %v279 = vld [vmem:[%s233 + $0x6] sm:$0x1]
        %v280 = vld [vmem:[%s233 + $0x7] sm:$0x1]
        %v281 = vld [vmem:[%s233 + $0x8] sm:$0x1]
        %v282 = vld [vmem:[%s233 + $0x9] sm:$0x1]
        %v283 = vld [vmem:[%s233 + $0xa] sm:$0x1]
        %v284 = vld [vmem:[%s233 + $0xb] sm:$0x1]
        %v285 = vld [vmem:[%s233 + $0xc] sm:$0x1]
        %v286 = vld [vmem:[%s233 + $0xd] sm:$0x1]
        %v287 = vld [vmem:[%s233 + $0xe] sm:$0x1]
        %v288 = vld [vmem:[%s233 + $0xf] sm:$0x1]
        %v305 = vlaneseq
        %v306 = vshrl.u32 %v305, 7
        %v307 = vsub.s32 0, %v306
        %v308 = vrot.slane %v273, %v307
        %v309 = vlaneseq
        %v310 = vshrl.u32 %v309, 7
        %v311 = vsub.s32 0, %v310
        %v312 = vrot.slane %v274, %v311
        %v313 = vlaneseq
        %v314 = vshrl.u32 %v313, 7
        %v315 = vsub.s32 0, %v314
        %v316 = vrot.slane %v275, %v315
        %v317 = vlaneseq
        %v318 = vshrl.u32 %v317, 7
        %v319 = vsub.s32 0, %v318
        %v320 = vrot.slane %v276, %v319
        %v321 = vlaneseq
        %v322 = vshrl.u32 %v321, 7
        %v323 = vsub.s32 0, %v322
        %v324 = vrot.slane %v277, %v323
        %v325 = vlaneseq
        %v326 = vshrl.u32 %v325, 7
        %v327 = vsub.s32 0, %v326
        %v328 = vrot.slane %v278, %v327
        %v329 = vlaneseq
        %v330 = vshrl.u32 %v329, 7
        %v331 = vsub.s32 0, %v330
        %v332 = vrot.slane %v279, %v331
        %v333 = vlaneseq
        %v334 = vshrl.u32 %v333, 7
        %v335 = vsub.s32 0, %v334
        %v336 = vrot.slane %v280, %v335
        %v337 = vlaneseq
        %v338 = vshrl.u32 %v337, 7
        %v339 = vsub.s32 0, %v338
        %v340 = vrot.slane %v281, %v339
        %v341 = vlaneseq
        %v342 = vshrl.u32 %v341, 7
        %v343 = vsub.s32 0, %v342
        %v344 = vrot.slane %v282, %v343
        %v345 = vlaneseq
        %v346 = vshrl.u32 %v345, 7
        %v347 = vsub.s32 0, %v346
        %v348 = vrot.slane %v283, %v347
        %v349 = vlaneseq
        %v350 = vshrl.u32 %v349, 7
        %v351 = vsub.s32 0, %v350
        %v352 = vrot.slane %v284, %v351
        %v353 = vlaneseq
        %v354 = vshrl.u32 %v353, 7
        %v355 = vsub.s32 0, %v354
        %v356 = vrot.slane %v285, %v355
        %v357 = vlaneseq
        %v358 = vshrl.u32 %v357, 7
        %v359 = vsub.s32 0, %v358
        %v360 = vrot.slane %v286, %v359
        %v361 = vlaneseq
        %v362 = vshrl.u32 %v361, 7
        %v363 = vsub.s32 0, %v362
        %v364 = vrot.slane %v287, %v363
        %v365 = vlaneseq
        %v366 = vshrl.u32 %v365, 7
        %v367 = vsub.s32 0, %v366
        %v368 = vrot.slane %v288, %v367
        %369 = vset.pattern.permute.xlu0 0
        %370 = vperm.xlu0 %369, %v308
        %v371 = vpop.permute.xlu0 %370
        %373 = vset.pattern.permute.xlu0 0
        %374 = vperm.xlu0 %373, %v312
        %v375 = vpop.permute.xlu0 %374
        %377 = vset.pattern.permute.xlu0 0
        %378 = vperm.xlu0 %377, %v316
        %v379 = vpop.permute.xlu0 %378
        %381 = vset.pattern.permute.xlu0 0
        %382 = vperm.xlu0 %381, %v320
        %v383 = vpop.permute.xlu0 %382
        %385 = vset.pattern.permute.xlu0 0
        %386 = vperm.xlu0 %385, %v324
        %v387 = vpop.permute.xlu0 %386
        %389 = vset.pattern.permute.xlu0 0
        %390 = vperm.xlu0 %389, %v328
        %v391 = vpop.permute.xlu0 %390
        %393 = vset.pattern.permute.xlu0 0
        %394 = vperm.xlu0 %393, %v332
        %v395 = vpop.permute.xlu0 %394
        %397 = vset.pattern.permute.xlu0 0
        %398 = vperm.xlu0 %397, %v336
        %v399 = vpop.permute.xlu0 %398
        %401 = vset.pattern.permute.xlu0 0
        %402 = vperm.xlu0 %401, %v340
        %v403 = vpop.permute.xlu0 %402
        %405 = vset.pattern.permute.xlu0 0
        %406 = vperm.xlu0 %405, %v344
        %v407 = vpop.permute.xlu0 %406
        %409 = vset.pattern.permute.xlu0 0
        %410 = vperm.xlu0 %409, %v348
        %v411 = vpop.permute.xlu0 %410
        %413 = vset.pattern.permute.xlu0 0
        %414 = vperm.xlu0 %413, %v352
        %v415 = vpop.permute.xlu0 %414
        %417 = vset.pattern.permute.xlu0 0
        %418 = vperm.xlu0 %417, %v356
        %v419 = vpop.permute.xlu0 %418
        %421 = vset.pattern.permute.xlu0 0
        %422 = vperm.xlu0 %421, %v360
        %v423 = vpop.permute.xlu0 %422
        %425 = vset.pattern.permute.xlu0 0
        %426 = vperm.xlu0 %425, %v364
        %v427 = vpop.permute.xlu0 %426
        %429 = vset.pattern.permute.xlu0 0
        %430 = vperm.xlu0 %429, %v368
        %v431 = vpop.permute.xlu0 %430
        %v433 = vmul.f32 %v241, %v371
        %v434 = vmul.f32 %v242, %v371
        %v435 = vmul.f32 %v243, %v375
        %v436 = vmul.f32 %v244, %v375
        %v437 = vmul.f32 %v245, %v379
        %v438 = vmul.f32 %v246, %v379
        %v439 = vmul.f32 %v247, %v383
        %v440 = vmul.f32 %v248, %v383
        %v441 = vmul.f32 %v249, %v387
        %v442 = vmul.f32 %v250, %v387
        %v443 = vmul.f32 %v251, %v391
        %v444 = vmul.f32 %v252, %v391
        %v445 = vmul.f32 %v253, %v395
        %v446 = vmul.f32 %v254, %v395
        %v447 = vmul.f32 %v255, %v399
        %v448 = vmul.f32 %v256, %v399
        %v449 = vmul.f32 %v257, %v403
        %v450 = vmul.f32 %v258, %v403
        %v451 = vmul.f32 %v259, %v407
        %v452 = vmul.f32 %v260, %v407
        %v453 = vmul.f32 %v261, %v411
        %v454 = vmul.f32 %v262, %v411
        %v455 = vmul.f32 %v263, %v415
        %v456 = vmul.f32 %v264, %v415
        %v457 = vmul.f32 %v265, %v419
        %v458 = vmul.f32 %v266, %v419
        %v459 = vmul.f32 %v267, %v423
        %v460 = vmul.f32 %v268, %v423
        %v461 = vmul.f32 %v269, %v427
        %v462 = vmul.f32 %v270, %v427
        %v463 = vmul.f32 %v271, %v431
        %v464 = vmul.f32 %v272, %v431
        %v465 = vld [vmem:[%s238] sm:$0x1]
        %v466 = vld [vmem:[%s238 + $0x1] sm:$0x1]
        %v467 = vld [vmem:[%s238 + $0x2] sm:$0x1]
        %v468 = vld [vmem:[%s238 + $0x3] sm:$0x1]
        %v469 = vld [vmem:[%s238 + $0x4] sm:$0x1]
        %v470 = vld [vmem:[%s238 + $0x5] sm:$0x1]
        %v471 = vld [vmem:[%s238 + $0x6] sm:$0x1]
        %v472 = vld [vmem:[%s238 + $0x7] sm:$0x1]
        %v473 = vld [vmem:[%s238 + $0x8] sm:$0x1]
        %v474 = vld [vmem:[%s238 + $0x9] sm:$0x1]
        %v475 = vld [vmem:[%s238 + $0xa] sm:$0x1]
        %v476 = vld [vmem:[%s238 + $0xb] sm:$0x1]
        %v477 = vld [vmem:[%s238 + $0xc] sm:$0x1]
        %v478 = vld [vmem:[%s238 + $0xd] sm:$0x1]
        %v479 = vld [vmem:[%s238 + $0xe] sm:$0x1]
        %v480 = vld [vmem:[%s238 + $0xf] sm:$0x1]
        %v497 = vlaneseq
        %v498 = vshrl.u32 %v497, 7
        %v499 = vsub.s32 0, %v498
        %v500 = vrot.slane %v465, %v499
        %v501 = vlaneseq
        %v502 = vshrl.u32 %v501, 7
        %v503 = vsub.s32 0, %v502
        %v504 = vrot.slane %v466, %v503
        %v505 = vlaneseq
        %v506 = vshrl.u32 %v505, 7
        %v507 = vsub.s32 0, %v506
        %v508 = vrot.slane %v467, %v507
        %v509 = vlaneseq
        %v510 = vshrl.u32 %v509, 7
        %v511 = vsub.s32 0, %v510
        %v512 = vrot.slane %v468, %v511
        %v513 = vlaneseq
        %v514 = vshrl.u32 %v513, 7
        %v515 = vsub.s32 0, %v514
        %v516 = vrot.slane %v469, %v515
        %v517 = vlaneseq
        %v518 = vshrl.u32 %v517, 7
        %v519 = vsub.s32 0, %v518
        %v520 = vrot.slane %v470, %v519
        %v521 = vlaneseq
        %v522 = vshrl.u32 %v521, 7
        %v523 = vsub.s32 0, %v522
        %v524 = vrot.slane %v471, %v523
        %v525 = vlaneseq
        %v526 = vshrl.u32 %v525, 7
        %v527 = vsub.s32 0, %v526
        %v528 = vrot.slane %v472, %v527
        %v529 = vlaneseq
        %v530 = vshrl.u32 %v529, 7
        %v531 = vsub.s32 0, %v530
        %v532 = vrot.slane %v473, %v531
        %v533 = vlaneseq
        %v534 = vshrl.u32 %v533, 7
        %v535 = vsub.s32 0, %v534
        %v536 = vrot.slane %v474, %v535
        %v537 = vlaneseq
        %v538 = vshrl.u32 %v537, 7
        %v539 = vsub.s32 0, %v538
        %v540 = vrot.slane %v475, %v539
        %v541 = vlaneseq
        %v542 = vshrl.u32 %v541, 7
        %v543 = vsub.s32 0, %v542
        %v544 = vrot.slane %v476, %v543
        %v545 = vlaneseq
        %v546 = vshrl.u32 %v545, 7
        %v547 = vsub.s32 0, %v546
        %v548 = vrot.slane %v477, %v547
        %v549 = vlaneseq
        %v550 = vshrl.u32 %v549, 7
        %v551 = vsub.s32 0, %v550
        %v552 = vrot.slane %v478, %v551
        %v553 = vlaneseq
        %v554 = vshrl.u32 %v553, 7
        %v555 = vsub.s32 0, %v554
        %v556 = vrot.slane %v479, %v555
        %v557 = vlaneseq
        %v558 = vshrl.u32 %v557, 7
        %v559 = vsub.s32 0, %v558
        %v560 = vrot.slane %v480, %v559
        %561 = vset.pattern.permute.xlu0 0
        %562 = vperm.xlu0 %561, %v500
        %v563 = vpop.permute.xlu0 %562
        %565 = vset.pattern.permute.xlu0 0
        %566 = vperm.xlu0 %565, %v504
        %v567 = vpop.permute.xlu0 %566
        %569 = vset.pattern.permute.xlu0 0
        %570 = vperm.xlu0 %569, %v508
        %v571 = vpop.permute.xlu0 %570
        %573 = vset.pattern.permute.xlu0 0
        %574 = vperm.xlu0 %573, %v512
        %v575 = vpop.permute.xlu0 %574
        %577 = vset.pattern.permute.xlu0 0
        %578 = vperm.xlu0 %577, %v516
        %v579 = vpop.permute.xlu0 %578
        %581 = vset.pattern.permute.xlu0 0
        %582 = vperm.xlu0 %581, %v520
        %v583 = vpop.permute.xlu0 %582
        %585 = vset.pattern.permute.xlu0 0
        %586 = vperm.xlu0 %585, %v524
        %v587 = vpop.permute.xlu0 %586
        %589 = vset.pattern.permute.xlu0 0
        %590 = vperm.xlu0 %589, %v528
        %v591 = vpop.permute.xlu0 %590
        %593 = vset.pattern.permute.xlu0 0
        %594 = vperm.xlu0 %593, %v532
        %v595 = vpop.permute.xlu0 %594
        %597 = vset.pattern.permute.xlu0 0
        %598 = vperm.xlu0 %597, %v536
        %v599 = vpop.permute.xlu0 %598
        %601 = vset.pattern.permute.xlu0 0
        %602 = vperm.xlu0 %601, %v540
        %v603 = vpop.permute.xlu0 %602
        %605 = vset.pattern.permute.xlu0 0
        %606 = vperm.xlu0 %605, %v544
        %v607 = vpop.permute.xlu0 %606
        %609 = vset.pattern.permute.xlu0 0
        %610 = vperm.xlu0 %609, %v548
        %v611 = vpop.permute.xlu0 %610
        %613 = vset.pattern.permute.xlu0 0
        %614 = vperm.xlu0 %613, %v552
        %v615 = vpop.permute.xlu0 %614
        %617 = vset.pattern.permute.xlu0 0
        %618 = vperm.xlu0 %617, %v556
        %v619 = vpop.permute.xlu0 %618
        %621 = vset.pattern.permute.xlu0 0
        %622 = vperm.xlu0 %621, %v560
        %v623 = vpop.permute.xlu0 %622
        %v625 = vadd.f32 %v433, %v563
        %v626 = vadd.f32 %v434, %v563
        %v627 = vadd.f32 %v435, %v567
        %v628 = vadd.f32 %v436, %v567
        %v629 = vadd.f32 %v437, %v571
        %v630 = vadd.f32 %v438, %v571
        %v631 = vadd.f32 %v439, %v575
        %v632 = vadd.f32 %v440, %v575
        %v633 = vadd.f32 %v441, %v579
        %v634 = vadd.f32 %v442, %v579
        %v635 = vadd.f32 %v443, %v583
        %v636 = vadd.f32 %v444, %v583
        %v637 = vadd.f32 %v445, %v587
        %v638 = vadd.f32 %v446, %v587
        %v639 = vadd.f32 %v447, %v591
        %v640 = vadd.f32 %v448, %v591
        %v641 = vadd.f32 %v449, %v595
        %v642 = vadd.f32 %v450, %v595
        %v643 = vadd.f32 %v451, %v599
        %v644 = vadd.f32 %v452, %v599
        %v645 = vadd.f32 %v453, %v603
        %v646 = vadd.f32 %v454, %v603
        %v647 = vadd.f32 %v455, %v607
        %v648 = vadd.f32 %v456, %v607
        %v649 = vadd.f32 %v457, %v611
        %v650 = vadd.f32 %v458, %v611
        %v651 = vadd.f32 %v459, %v615
        %v652 = vadd.f32 %v460, %v615
        %v653 = vadd.f32 %v461, %v619
        %v654 = vadd.f32 %v462, %v619
        %v655 = vadd.f32 %v463, %v623
        %v656 = vadd.f32 %v464, %v623
        %vm657 = vcmask 130048
        %658 = vst.msk [vmem:[%s218] sm:$0xff] %vm657, %v625
        %659 = vst.msk [vmem:[%s218 + $0x8] sm:$0xff] %vm657, %v626
        %660 = vst.msk [vmem:[%s218 + $0x10] sm:$0xff] %vm657, %v627
        %661 = vst.msk [vmem:[%s218 + $0x18] sm:$0xff] %vm657, %v628
        %662 = vst.msk [vmem:[%s218 + $0x20] sm:$0xff] %vm657, %v629
        %663 = vst.msk [vmem:[%s218 + $0x28] sm:$0xff] %vm657, %v630
        %664 = vst.msk [vmem:[%s218 + $0x30] sm:$0xff] %vm657, %v631
        %665 = vst.msk [vmem:[%s218 + $0x38] sm:$0xff] %vm657, %v632
        %666 = vst.msk [vmem:[%s218 + $0x40] sm:$0xff] %vm657, %v633
        %667 = vst.msk [vmem:[%s218 + $0x48] sm:$0xff] %vm657, %v634
        %668 = vst.msk [vmem:[%s218 + $0x50] sm:$0xff] %vm657, %v635
        %669 = vst.msk [vmem:[%s218 + $0x58] sm:$0xff] %vm657, %v636
        %670 = vst.msk [vmem:[%s218 + $0x60] sm:$0xff] %vm657, %v637
        %671 = vst.msk [vmem:[%s218 + $0x68] sm:$0xff] %vm657, %v638
        %672 = vst.msk [vmem:[%s218 + $0x70] sm:$0xff] %vm657, %v639
        %673 = vst.msk [vmem:[%s218 + $0x78] sm:$0xff] %vm657, %v640
        %674 = vst.msk [vmem:[%s218 + $0x80] sm:$0xff] %vm657, %v641
        %675 = vst.msk [vmem:[%s218 + $0x88] sm:$0xff] %vm657, %v642
        %676 = vst.msk [vmem:[%s218 + $0x90] sm:$0xff] %vm657, %v643
        %677 = vst.msk [vmem:[%s218 + $0x98] sm:$0xff] %vm657, %v644
        %678 = vst.msk [vmem:[%s218 + $0xa0] sm:$0xff] %vm657, %v645
        %679 = vst.msk [vmem:[%s218 + $0xa8] sm:$0xff] %vm657, %v646
        %680 = vst.msk [vmem:[%s218 + $0xb0] sm:$0xff] %vm657, %v647
        %681 = vst.msk [vmem:[%s218 + $0xb8] sm:$0xff] %vm657, %v648
        %682 = vst.msk [vmem:[%s218 + $0xc0] sm:$0xff] %vm657, %v649
        %683 = vst.msk [vmem:[%s218 + $0xc8] sm:$0xff] %vm657, %v650
        %684 = vst.msk [vmem:[%s218 + $0xd0] sm:$0xff] %vm657, %v651
        %685 = vst.msk [vmem:[%s218 + $0xd8] sm:$0xff] %vm657, %v652
        %686 = vst.msk [vmem:[%s218 + $0xe0] sm:$0xff] %vm657, %v653
        %687 = vst.msk [vmem:[%s218 + $0xe8] sm:$0xff] %vm657, %v654
        %688 = vst.msk [vmem:[%s218 + $0xf0] sm:$0xff] %vm657, %v655
        %689 = vst.msk [vmem:[%s218 + $0xf8] sm:$0xff] %vm657, %v656
        %s690 = sand.u32 %s119, 1
        %s691 = scalar_lea.sflag [#allocation3], %s690
        %s692 = sand.u32 %s119, 1
        %s693 = smul.addr %s692, 256
        %s694 = scalar_lea.vmem [#allocation2], %s693
        // Predicated region
        $region33: #{conv_block.3} parent=31 // pred_check
          %p695 = pneg %p129
        $region34: #{conv_block.3} parent=31 // pred_check_branch
          %697 = sbr.rel (%p695) target = $region36
        $region35: #{conv_block.3} parent=31 // pred_region
          %s698 = smul.u32 16, %s22
          %s700 = ssub.s32 4096, 4096
          %701 = vsyncadd %s691, %s700
          %s702 = smul.addr %s698, 2
          %s703 = smul.addr %s21, 32
          %s704 = sadd.s32 %s702, %s703
          %s705 = smul.addr %s704, 128
          %s706 = scalar_lea.hbm %s3, %s705
          %s707 = sshll.u32 %s694, 4
          %s708 = int_to_ptr.vmem [resolvable:$true] %s707
          %713 = dma.vmem_to_hbm [thread:$0]  %s708, 4096, %s706, %s691, 128, 128, 8
        $region36: #{conv_block.3} parent=31 // pred_fallthru
          _
      $region32: #{conv_block.3} parent=5 // pred_fallthru
        _
      %p714 = scmp.le.s32.totalorder 2, %s12
      // Predicated region
      $region37: #{conv_block.3} parent=5 // pred_check
        %p715 = pneg %p714
      $region38: #{conv_block.3} parent=5 // pred_check_branch
        %717 = sbr.rel (%p715) target = $region40
      $region39: #{conv_block.3} parent=5 // pred_region
        %s718 = ssub.s32 %s12, 2
        // Predicated region
        $region41: #{conv_block.3} parent=39 // pred_check
          %p719 = pneg %p135
        $region42: #{conv_block.3} parent=39 // pred_check_branch
          %721 = sbr.rel (%p719) target = $region44
        $region43: #{conv_block.3} parent=39 // pred_region
          %s722 = sand.u32 %s120, 1
          %s723 = scalar_lea.sflag [#allocation3], %s722
          %s724 = sand.u32 %s120, 1
          %s725 = smul.addr %s724, 256
          %s726 = scalar_lea.vmem [#allocation2], %s725
          %727 = dma.done %s723, 4096
        $region44: #{conv_block.3} parent=39 // pred_fallthru
          _
      $region40: #{conv_block.3} parent=5 // pred_fallthru
        _
    $region6: #{conv_block.3} parent=1 // loop_footer
      %s16 = sadd.s32 1, %s12
    $region7: #{conv_block.3} parent=1 // loop_footer_branch
      %11 = sbr.rel target = $region3
    $region8: #{conv_block.3} parent=1 // loop_exit
      _
    %728 = vsyncpa [#allocation3], 1
    %s729 = scalar_lea.sflag [#allocation3], 1
    %730 = vsyncpa %s729, 1

// kernel: conv_block.2
$region0: #{conv_block.2}
  #allocation0 [shape = 'u32[]', space=smem, size = 0x4, offset = 0x4, fixed_abs, tag = 'smem constant byte address 0x4 - core index']
  #allocation1 [shape = 'u32[144,128]{1,0:T(1,128)}', space=vmem, size = 0x12000, scoped, tag = 'internal scratch']
  %s0 = inlined_call_operand.vmem [shape: bf16[2,8,768], index: 0, kind: input, shape index: {}, may-alias: {0,1}]
  %s1 = inlined_call_operand.vmem [shape: bf16[2,8,768], index: 1, kind: input, shape index: {}, may-alias: {0,1}]
  %s2 = inlined_call_operand.vmem [shape: bf16[9,16,8], index: 2, kind: input, shape index: {}]
  %s3 = inlined_call_operand.vmem [shape: f32[1,1,384], index: 3, kind: input, shape index: {}]
  %s4 = inlined_call_operand.vmem [shape: f32[2,16,384], index: 4, kind: output, shape index: {0}]
  %s5 = inlined_call_operand.vmem [shape: f32[2,1,16,1], index: 5, kind: output, shape index: {1}]
  %s6 = inlined_call_operand.vmem [shape: f32[2,1,16,1], index: 6, kind: output, shape index: {2}]
  %7 = xla_tuple %s4, %s5, %s6
  %s8 = sld [smem:[#allocation0]]
  $region65: #{conv_block.2} parent=0
    _
  %s10 = ssub.s32 1, %s8
  %s11 = scalar_select 0, %s10, %s8
  loop: start=0, step=1, limit=4
  $region2: #{conv_block.2} parent=0 // loop_pre_header
    _
  $region3: #{conv_block.2} parent=0 // loop_header
    %s13 = sphi 0, %s17
    %p14 = scmp.ge.s32.totalorder %s13, 4
    %s20 = sphi 0, %s39
    %s21 = sphi 0, %s35
    %s22 = sphi 0, %s31
    %s23 = sphi 0, %s20
    %s24 = sphi 0, %s21
    %s25 = sphi 0, %s22
    %s26 = sphi 0, %s23
    %s27 = sphi 0, %s24
    %s28 = sphi 0, %s25
    %s44 = sphi 0, %s46
    %s47 = sphi 0, %s44
    %s48 = sphi 0, %s47
    %s64 = sphi 0, %s48
    %s74 = sphi 0, %s76
    %s77 = sphi 0, %s74
    %s78 = sphi 0, %s77
    %s94 = sphi 0, %s78
    %s100 = sphi 0, %s102
    %s103 = sphi 0, %s100
    %s104 = sphi 0, %s103
    %s120 = sphi 0, %s104
    %s126 = sphi 0, %s128
    %s129 = sphi 0, %s126
    %s130 = sphi 0, %s129
    %s146 = sphi 0, %s130
    %s156 = sphi 0, %s158
    %s159 = sphi 0, %s156
    %s160 = sphi 0, %s159
    %s176 = sphi 0, %s160
    %s186 = sphi 0, %s188
    %s189 = sphi 0, %s186
    %s190 = sphi 0, %s189
    %s206 = sphi 0, %s190
    %s216 = sphi 0, %s218
    %s219 = sphi 0, %s216
    %s220 = sphi 0, %s219
    %s236 = sphi 0, %s220
  $region4: #{conv_block.2} parent=0 // loop_header_branch
    %16 = sbr.rel (%p14) target = $region8
  $region5: #{conv_block.2} parent=0 // loop_body
    %s18 = ssub.s32 %s13, 1
    %s19 = ssub.s32 %s13, 2
    %s29 = sadd.s32 1, %s22
    %p30 = scmp.ge.s32.totalorder %s29, 1
    %s31 = scalar_select %p30, 0, %s29
    %s32 = sadd.s32 1, %s21
    %s33 = scalar_select %p30, %s32, %s21
    %p34 = scmp.ge.s32.totalorder %s33, 1
    %s35 = scalar_select %p34, 0, %s33
    %s36 = sadd.s32 1, %s20
    %s37 = scalar_select %p34, %s36, %s20
    %p38 = scmp.ge.s32.totalorder %s37, 2
    %s39 = scalar_select %p38, 0, %s37
    %s40 = ssub.s32 %s20, %s39
    %s41 = ssub.s32 %s22, %s31
    %s42 = sor.u32 %s40, %s41
    %p43 = scmp.eq.s32.totalorder %s42, 0
    %s45 = sadd.s32 %s44, 1
    %s46 = scalar_select %p43, %s44, %s45
    %p49 = pneg %p43
    %p50 = scmp.eq.s32.totalorder %s13, 1
    %p51 = por %p49, %p50
    %p52 = scmp.ne.s32.totalorder %s44, %s47
    %p53 = scmp.eq.s32.totalorder %s13, 0
    %p54 = por %p52, %p53
    %p55 = scmp.ne.s32.totalorder %s44, %s47
    %p56 = scmp.eq.s32.totalorder %s18, 1
    %p57 = por %p55, %p56
    %p58 = scmp.ne.s32.totalorder %s47, %s48
    %p59 = scmp.eq.s32.totalorder %s18, 0
    %p60 = por %p58, %p59
    %p61 = scmp.ne.s32.totalorder %s47, %s48
    %p62 = scmp.eq.s32.totalorder %s19, 1
    %p63 = por %p61, %p62
    %p65 = scmp.ne.s32.totalorder %s48, %s64
    %p66 = scmp.eq.s32.totalorder %s19, 0
    %p67 = por %p65, %p66
    %s68 = sadd.s32 %s22, 1
    %s69 = sadd.s32 %s31, 1
    %s70 = ssub.s32 %s20, %s39
    %s71 = ssub.s32 %s68, %s69
    %s72 = sor.u32 %s70, %s71
    %p73 = scmp.eq.s32.totalorder %s72, 0
    %s75 = sadd.s32 %s74, 1
    %s76 = scalar_select %p73, %s74, %s75
    %p79 = pneg %p73
    %p80 = scmp.eq.s32.totalorder %s13, 1
    %p81 = por %p79, %p80
    %p82 = scmp.ne.s32.totalorder %s74, %s77
    %p83 = scmp.eq.s32.totalorder %s13, 0
    %p84 = por %p82, %p83
    %p85 = scmp.ne.s32.totalorder %s74, %s77
    %p86 = scmp.eq.s32.totalorder %s18, 1
    %p87 = por %p85, %p86
    %p88 = scmp.ne.s32.totalorder %s77, %s78
    %p89 = scmp.eq.s32.totalorder %s18, 0
    %p90 = por %p88, %p89
    %p91 = scmp.ne.s32.totalorder %s77, %s78
    %p92 = scmp.eq.s32.totalorder %s19, 1
    %p93 = por %p91, %p92
    %p95 = scmp.ne.s32.totalorder %s78, %s94
    %p96 = scmp.eq.s32.totalorder %s19, 0
    %p97 = por %p95, %p96
    %s98 = ssub.s32 %s21, %s35
    %p99 = scmp.eq.s32.totalorder %s98, 0
    %s101 = sadd.s32 %s100, 1
    %s102 = scalar_select %p99, %s100, %s101
    %p105 = pneg %p99
    %p106 = scmp.eq.s32.totalorder %s13, 1
    %p107 = por %p105, %p106
    %p108 = scmp.ne.s32.totalorder %s100, %s103
    %p109 = scmp.eq.s32.totalorder %s13, 0
    %p110 = por %p108, %p109
    %p111 = scmp.ne.s32.totalorder %s100, %s103
    %p112 = scmp.eq.s32.totalorder %s18, 1
    %p113 = por %p111, %p112
    %p114 = scmp.ne.s32.totalorder %s103, %s104
    %p115 = scmp.eq.s32.totalorder %s18, 0
    %p116 = por %p114, %p115
    %p117 = scmp.ne.s32.totalorder %s103, %s104
    %p118 = scmp.eq.s32.totalorder %s19, 1
    %p119 = por %p117, %p118
    %p121 = scmp.ne.s32.totalorder %s104, %s120
    %p122 = scmp.eq.s32.totalorder %s19, 0
    %p123 = por %p121, %p122
    %s124 = ssub.s32 %s22, %s31
    %p125 = scmp.eq.s32.totalorder %s124, 0
    %s127 = sadd.s32 %s126, 1
    %s128 = scalar_select %p125, %s126, %s127
    %p131 = pneg %p125
    %p132 = scmp.eq.s32.totalorder %s13, 1
    %p133 = por %p131, %p132
    %p134 = scmp.ne.s32.totalorder %s126, %s129
    %p135 = scmp.eq.s32.totalorder %s13, 0
    %p136 = por %p134, %p135
    %p137 = scmp.ne.s32.totalorder %s126, %s129
    %p138 = scmp.eq.s32.totalorder %s18, 1
    %p139 = por %p137, %p138
    %p140 = scmp.ne.s32.totalorder %s129, %s130
    %p141 = scmp.eq.s32.totalorder %s18, 0
    %p142 = por %p140, %p141
    %p143 = scmp.ne.s32.totalorder %s129, %s130
    %p144 = scmp.eq.s32.totalorder %s19, 1
    %p145 = por %p143, %p144
    %p147 = scmp.ne.s32.totalorder %s130, %s146
    %p148 = scmp.eq.s32.totalorder %s19, 0
    %p149 = por %p147, %p148
    %s150 = ssub.s32 %s20, %s39
    %s151 = ssub.s32 %s21, %s35
    %s152 = sor.u32 %s150, %s151
    %s153 = ssub.s32 %s22, %s31
    %s154 = sor.u32 %s152, %s153
    %p155 = scmp.eq.s32.totalorder %s154, 0
    %s157 = sadd.s32 %s156, 1
    %s158 = scalar_select %p155, %s156, %s157
    %p161 = pneg %p155
    %p162 = scmp.eq.s32.totalorder %s13, 1
    %p163 = por %p161, %p162
    %p164 = scmp.ne.s32.totalorder %s156, %s159
    %p165 = scmp.eq.s32.totalorder %s13, 0
    %p166 = por %p164, %p165
    %p167 = scmp.ne.s32.totalorder %s156, %s159
    %p168 = scmp.eq.s32.totalorder %s18, 1
    %p169 = por %p167, %p168
    %p170 = scmp.ne.s32.totalorder %s159, %s160
    %p171 = scmp.eq.s32.totalorder %s18, 0
    %p172 = por %p170, %p171
    %p173 = scmp.ne.s32.totalorder %s159, %s160
    %p174 = scmp.eq.s32.totalorder %s19, 1
    %p175 = por %p173, %p174
    %p177 = scmp.ne.s32.totalorder %s160, %s176
    %p178 = scmp.eq.s32.totalorder %s19, 0
    %p179 = por %p177, %p178
    %s180 = ssub.s32 %s20, %s39
    %s181 = ssub.s32 %s22, %s31
    %s182 = sor.u32 %s180, %s181
    %s183 = ssub.s32 %s21, %s35
    %s184 = sor.u32 %s182, %s183
    %p185 = scmp.eq.s32.totalorder %s184, 0
    %s187 = sadd.s32 %s186, 1
    %s188 = scalar_select %p185, %s186, %s187
    %p191 = pneg %p185
    %p192 = scmp.eq.s32.totalorder %s13, 1
    %p193 = por %p191, %p192
    %p194 = scmp.ne.s32.totalorder %s186, %s189
    %p195 = scmp.eq.s32.totalorder %s13, 0
    %p196 = por %p194, %p195
    %p197 = scmp.ne.s32.totalorder %s186, %s189
    %p198 = scmp.eq.s32.totalorder %s18, 1
    %p199 = por %p197, %p198
    %p200 = scmp.ne.s32.totalorder %s189, %s190
    %p201 = scmp.eq.s32.totalorder %s18, 0
    %p202 = por %p200, %p201
    %p203 = scmp.ne.s32.totalorder %s189, %s190
    %p204 = scmp.eq.s32.totalorder %s19, 1
    %p205 = por %p203, %p204
    %p207 = scmp.ne.s32.totalorder %s190, %s206
    %p208 = scmp.eq.s32.totalorder %s19, 0
    %p209 = por %p207, %p208
    %s210 = ssub.s32 %s20, %s39
    %s211 = ssub.s32 %s22, %s31
    %s212 = sor.u32 %s210, %s211
    %s213 = ssub.s32 %s21, %s35
    %s214 = sor.u32 %s212, %s213
    %p215 = scmp.eq.s32.totalorder %s214, 0
    %s217 = sadd.s32 %s216, 1
    %s218 = scalar_select %p215, %s216, %s217
    %p221 = pneg %p215
    %p222 = scmp.eq.s32.totalorder %s13, 1
    %p223 = por %p221, %p222
    %p224 = scmp.ne.s32.totalorder %s216, %s219
    %p225 = scmp.eq.s32.totalorder %s13, 0
    %p226 = por %p224, %p225
    %p227 = scmp.ne.s32.totalorder %s216, %s219
    %p228 = scmp.eq.s32.totalorder %s18, 1
    %p229 = por %p227, %p228
    %p230 = scmp.ne.s32.totalorder %s219, %s220
    %p231 = scmp.eq.s32.totalorder %s18, 0
    %p232 = por %p230, %p231
    %p233 = scmp.ne.s32.totalorder %s219, %s220
    %p234 = scmp.eq.s32.totalorder %s19, 1
    %p235 = por %p233, %p234
    %p237 = scmp.ne.s32.totalorder %s220, %s236
    %p238 = scmp.eq.s32.totalorder %s19, 0
    %p239 = por %p237, %p238
    %p240 = scmp.le.s32.totalorder 1, %s13
    %p241 = scmp.lt.s32.totalorder %s13, 3
    %p242 = pnand %p240, %p241
    %p243 = pneg %p242
    // Predicated region
    $region9: #{conv_block.2} parent=5 // pred_check
      _
    $region10: #{conv_block.2} parent=5 // pred_check_branch
      %245 = sbr.rel (%p242) target = $region12
    $region11: #{conv_block.2} parent=5 // pred_region
      %s246 = ssub.s32 %s13, 1
      // Predicated region
      $region13: #{conv_block.2} parent=11 // pred_check
        %p247 = pneg %p116
      $region14: #{conv_block.2} parent=11 // pred_check_branch
        %249 = sbr.rel (%p247) target = $region16
      $region15: #{conv_block.2} parent=11 // pred_region
        %s250 = smul.u32 2, %s24
        %p251 = scmp.lt.s32.totalorder %s250, 1
        %s252 = scalar_select %p251, %s250, 1
        %s253 = smul.addr %s252, 4
        %s254 = scalar_lea.vmem %s2, %s253
        %s255 = smul.u32 2, %s24
      $region16: #{conv_block.2} parent=11 // pred_fallthru
        _
      // Predicated region
      $region17: #{conv_block.2} parent=11 // pred_check
        %p256 = pneg %p142
      $region18: #{conv_block.2} parent=11 // pred_check_branch
        %258 = sbr.rel (%p256) target = $region20
      $region19: #{conv_block.2} parent=11 // pred_region
        %p259 = scmp.lt.s32.totalorder %s25, 0
        %s260 = scalar_select %p259, %s25, 0
        %s261 = smul.addr %s260, 3
        %s262 = scalar_lea.vmem %s3, %s261
      $region20: #{conv_block.2} parent=11 // pred_fallthru
        _
    $region12: #{conv_block.2} parent=5 // pred_fallthru
      _
    %p263 = scmp.lt.s32.totalorder %s13, 2
    // Predicated region
    $region21: #{conv_block.2} parent=5 // pred_check
      %p264 = pneg %p263
    $region22: #{conv_block.2} parent=5 // pred_check_branch
      %266 = sbr.rel (%p264) target = $region24
    $region23: #{conv_block.2} parent=5 // pred_region
      // Predicated region
      $region25: #{conv_block.2} parent=23 // pred_check
        %p267 = pneg %p54
      $region26: #{conv_block.2} parent=23 // pred_check_branch
        %269 = sbr.rel (%p267) target = $region28
      $region27: #{conv_block.2} parent=23 // pred_region
        %s270 = smul.u32 3, %s22
        %p271 = scmp.lt.s32.totalorder %s20, 1
        %s272 = scalar_select %p271, %s20, 1
        %p273 = scmp.lt.s32.totalorder %s270, 5
        %s274 = scalar_select %p273, %s270, 5
        %s275 = smul.addr %s272, 6
        %s276 = sadd.s32 %s274, %s275
        %s277 = smul.addr %s276, 4
        %s278 = scalar_lea.vmem %s0, %s277
        %s279 = smul.u32 3, %s22
      $region28: #{conv_block.2} parent=23 // pred_fallthru
        _
      // Predicated region
      $region29: #{conv_block.2} parent=23 // pred_check
        %p280 = pneg %p84
      $region30: #{conv_block.2} parent=23 // pred_check_branch
        %282 = sbr.rel (%p280) target = $region32
      $region31: #{conv_block.2} parent=23 // pred_region
        %s283 = sadd.s32 %s22, 1
        %s284 = smul.u32 3, %s283
        %p285 = scmp.lt.s32.totalorder %s20, 1
        %s286 = scalar_select %p285, %s20, 1
        %p287 = scmp.lt.s32.totalorder %s284, 5
        %s288 = scalar_select %p287, %s284, 5
        %s289 = smul.addr %s286, 6
        %s290 = sadd.s32 %s288, %s289
        %s291 = smul.addr %s290, 4
        %s292 = scalar_lea.vmem %s1, %s291
        %s293 = sadd.s32 %s22, 1
        %s294 = smul.u32 3, %s293
      $region32: #{conv_block.2} parent=23 // pred_fallthru
        _
    $region24: #{conv_block.2} parent=5 // pred_fallthru
      _
    %p295 = scmp.le.s32.totalorder 1, %s13
    %p296 = scmp.lt.s32.totalorder %s13, 3
    %p297 = pnand %p295, %p296
    %p298 = pneg %p297
    // Predicated region
    $region33: #{conv_block.2} parent=5 // pred_check
      _
    $region34: #{conv_block.2} parent=5 // pred_check_branch
      %300 = sbr.rel (%p297) target = $region36
    $region35: #{conv_block.2} parent=5 // pred_region
      %s301 = ssub.s32 %s13, 1
      %s302 = smul.u32 3, %s25
      %p303 = scmp.lt.s32.totalorder %s23, 1
      %s304 = scalar_select %p303, %s23, 1
      %p305 = scmp.lt.s32.totalorder %s302, 5
      %s306 = scalar_select %p305, %s302, 5
      %s307 = smul.addr %s304, 6
      %s308 = sadd.s32 %s306, %s307
      %s309 = smul.addr %s308, 4
      %s310 = scalar_lea.vmem %s0, %s309
      %p311 = pneg %p60
      %p312 = pneg %p57
      %s313 = sadd.s32 %s25, 1
      %s314 = smul.u32 3, %s313
      %p315 = scmp.lt.s32.totalorder %s23, 1
      %s316 = scalar_select %p315, %s23, 1
      %p317 = scmp.lt.s32.totalorder %s314, 5
      %s318 = scalar_select %p317, %s314, 5
      %s319 = smul.addr %s316, 6
      %s320 = sadd.s32 %s318, %s319
      %s321 = smul.addr %s320, 4
      %s322 = scalar_lea.vmem %s1, %s321
      %p323 = pneg %p90
      %p324 = pneg %p87
      %s325 = smul.u32 2, %s24
      %p326 = scmp.lt.s32.totalorder %s325, 1
      %s327 = scalar_select %p326, %s325, 1
      %s328 = smul.addr %s327, 4
      %s329 = scalar_lea.vmem %s2, %s328
      %p330 = pneg %p116
      %p331 = pneg %p113
      %p332 = scmp.lt.s32.totalorder %s25, 0
      %s333 = scalar_select %p332, %s25, 0
      %s334 = smul.addr %s333, 3
      %s335 = scalar_lea.vmem %s3, %s334
      %p336 = pneg %p142
      %p337 = pneg %p139
      %p338 = pneg %p172
      %p339 = pneg %p169
      %s340 = smul.u32 2, %s24
      %s341 = smul.u32 3, %s25
      %p342 = scmp.lt.s32.totalorder %s23, 1
      %s343 = scalar_select %p342, %s23, 1
      %p344 = scmp.lt.s32.totalorder %s340, 1
      %s345 = scalar_select %p344, %s340, 1
      %p346 = scmp.lt.s32.totalorder %s341, 2
      %s347 = scalar_select %p346, %s341, 2
      %s348 = smul.addr %s345, 3
      %s349 = sadd.s32 %s347, %s348
      %s350 = smul.addr %s343, 6
      %s351 = sadd.s32 %s349, %s350
      %s352 = smul.addr %s351, 8
      %s353 = scalar_lea.vmem %s4, %s352
      %p354 = pneg %p202
      %p355 = pneg %p199
      %s356 = smul.u32 2, %s24
      %p357 = scmp.lt.s32.totalorder %s23, 1
      %s358 = scalar_select %p357, %s23, 1
      %p359 = scmp.lt.s32.totalorder %s25, 0
      %s360 = scalar_select %p359, %s25, 0
      %p361 = scmp.lt.s32.totalorder %s356, 1
      %s362 = scalar_select %p361, %s356, 1
      %s363 = smul.addr %s360, 2
      %s364 = sadd.s32 %s362, %s363
      %s365 = smul.addr %s358, 2
      %s366 = sadd.s32 %s364, %s365
      %s367 = smul.addr %s366, 8
      %s368 = scalar_lea.vmem %s5, %s367
      %p369 = pneg %p232
      %p370 = pneg %p229
      %s371 = smul.u32 2, %s24
      %p372 = scmp.lt.s32.totalorder %s23, 1
      %s373 = scalar_select %p372, %s23, 1
      %p374 = scmp.lt.s32.totalorder %s25, 0
      %s375 = scalar_select %p374, %s25, 0
      %p376 = scmp.lt.s32.totalorder %s371, 1
      %s377 = scalar_select %p376, %s371, 1
      %s378 = smul.addr %s375, 2
      %s379 = sadd.s32 %s377, %s378
      %s380 = smul.addr %s373, 2
      %s381 = sadd.s32 %s379, %s380
      %s382 = smul.addr %s381, 8
      %s383 = scalar_lea.vmem %s6, %s382
      %s384 = smul.u32 3, %s25
      %p385 = scmp.lt.s32.totalorder %s23, 1
      %s386 = scalar_select %p385, %s23, 1
      %p387 = scmp.lt.s32.totalorder %s384, 5
      %s388 = scalar_select %p387, %s384, 5
      %s389 = smul.addr %s386, 6
      %s390 = sadd.s32 %s388, %s389
      %s391 = smul.addr %s390, 4
      %s392 = scalar_lea.vmem %s0, %s391
      %s393 = smul.u32 3, %s25
      %s394 = sadd.s32 %s25, 1
      %s395 = smul.u32 3, %s394
      %p396 = scmp.lt.s32.totalorder %s23, 1
      %s397 = scalar_select %p396, %s23, 1
      %p398 = scmp.lt.s32.totalorder %s395, 5
      %s399 = scalar_select %p398, %s395, 5
      %s400 = smul.addr %s397, 6
      %s401 = sadd.s32 %s399, %s400
      %s402 = smul.addr %s401, 4
      %s403 = scalar_lea.vmem %s1, %s402
      %s404 = sadd.s32 %s25, 1
      %s405 = smul.u32 3, %s404
      %s406 = smul.u32 2, %s24
      %p407 = scmp.lt.s32.totalorder %s406, 1
      %s408 = scalar_select %p407, %s406, 1
      %s409 = smul.addr %s408, 4
      %s410 = scalar_lea.vmem %s2, %s409
      %s411 = smul.u32 2, %s24
      %p412 = scmp.lt.s32.totalorder %s25, 0
      %s413 = scalar_select %p412, %s25, 0
      %s414 = smul.addr %s413, 3
      %s415 = scalar_lea.vmem %s3, %s414
      %s416 = smul.u32 2, %s24
      %s417 = smul.u32 3, %s25
      %p418 = scmp.lt.s32.totalorder %s23, 1
      %s419 = scalar_select %p418, %s23, 1
      %p420 = scmp.lt.s32.totalorder %s416, 1
      %s421 = scalar_select %p420, %s416, 1
      %p422 = scmp.lt.s32.totalorder %s417, 2
      %s423 = scalar_select %p422, %s417, 2
      %s424 = smul.addr %s421, 3
      %s425 = sadd.s32 %s423, %s424
      %s426 = smul.addr %s419, 6
      %s427 = sadd.s32 %s425, %s426
      %s428 = smul.addr %s427, 8
      %s429 = scalar_lea.vmem %s4, %s428
      %s430 = smul.u32 2, %s24
      %s431 = smul.u32 3, %s25
      %s432 = smul.u32 2, %s24
      %p433 = scmp.lt.s32.totalorder %s23, 1
      %s434 = scalar_select %p433, %s23, 1
      %p435 = scmp.lt.s32.totalorder %s25, 0
      %s436 = scalar_select %p435, %s25, 0
      %p437 = scmp.lt.s32.totalorder %s432, 1
      %s438 = scalar_select %p437, %s432, 1
      %s439 = smul.addr %s436, 2
      %s440 = sadd.s32 %s438, %s439
      %s441 = smul.addr %s434, 2
      %s442 = sadd.s32 %s440, %s441
      %s443 = smul.addr %s442, 8
      %s444 = scalar_lea.vmem %s5, %s443
      %s445 = smul.u32 2, %s24
      %s446 = smul.u32 2, %s24
      %p447 = scmp.lt.s32.totalorder %s23, 1
      %s448 = scalar_select %p447, %s23, 1
      %p449 = scmp.lt.s32.totalorder %s25, 0
      %s450 = scalar_select %p449, %s25, 0
      %p451 = scmp.lt.s32.totalorder %s446, 1
      %s452 = scalar_select %p451, %s446, 1
      %s453 = smul.addr %s450, 2
      %s454 = sadd.s32 %s452, %s453
      %s455 = smul.addr %s448, 2
      %s456 = sadd.s32 %s454, %s455
      %s457 = smul.addr %s456, 8
      %s458 = scalar_lea.vmem %s6, %s457
      %s459 = smul.u32 2, %s24
      %v461 = vld [vmem:[%s392] sm:$0xff]
      %v462 = vld [vmem:[%s392 + $0x8] sm:$0xf]
      %v463 = vld [vmem:[%s403] sm:$0xff]
      %v466 = vunpack.c.l.b16 %v461
      %v467 = vunpack.c.h.b16 %v461
      %v468 = vunpack.c.l.b16 %v462
      %v469 = vpack.c.b16 %v466, %v466
      %v470 = vpack.c.b16 %v467, %v467
      %v471 = vpack.c.b16 %v468, %v468
      %v473 = vunpack.c.l.b16 %v463
      %v474 = vpack.c.b16 %v473, %v473
      %v475 = vld [vmem:[%s410] sm:$0xf]
      %v476 = vld [vmem:[%s410 + $0x4] sm:$0xf]
      %s477 = scalar_lea.vmem %s410, 8
      %v478 = vld [vmem:[%s477] sm:$0xf]
      %v479 = vld [vmem:[%s477 + $0x4] sm:$0xf]
      %v482 = vunpack.c.l.b16 %v478
      %v483 = vunpack.c.l.b16 %v479
      %v484 = vpack.c.b16 %v483, %v482
      %485 = vrot.lane.b32.xlu0 %v469, 127
      %v486 = vpop.permute.xlu0 %485
      %487 = vrot.lane.b32.xlu0 %v470, 127
      %v488 = vpop.permute.xlu0 %487
      %489 = vrot.lane.b32.xlu0 %v471, 127
      %v490 = vpop.permute.xlu0 %489
      %491 = vrot.lane.b32.xlu0 %v474, 127
      %v492 = vpop.permute.xlu0 %491
      %vm493 = vcmask 1039360
      %v494 = vsel %vm493, %v486, %v488
      %v495 = vsel %vm493, %v488, %v490
      %v496 = vsel %vm493, %v490, %v492
      %vm497 = vcmask 64512
      %v499 = vsel %vm497, %v484, 0
      %vm501 = vcmask 1043456
      %v503 = vsel %vm501, %v494, 0
      %v506 = vsel %vm501, %v495, 0
      %v509 = vsel %vm501, %v496, 0
      %511 = vmatprep.subr.bf16.mxu0 %v506
      %512 = vmatpush1.bf16.msra.mxu0 %v503
      %513 = vmatprep.subr.bf16.mxu0 0
      %514 = vmatpush1.bf16.msra.mxu0 0
      %515 = vmatprep.subr.bf16.mxu0 0
      %516 = vmatpush1.bf16.msra.mxu0 0
      %517 = vmatprep.subr.bf16.mxu0 0
      %518 = vmatpush1.bf16.msra.mxu0 0
      %519 = vmatprep.subr.bf16.mxu0 0
      %520 = vmatpush1.bf16.msra.mxu0 0
      %521 = vmatprep.subr.bf16.mxu0 0
      %522 = vmatpush1.bf16.msra.mxu0 0
      %523 = vmatprep.subr.bf16.mxu0 0
      %524 = vmatpush1.bf16.msra.mxu0 0
      %525 = vmatprep.subr.bf16.mxu0 0
      %526 = vmatpush1.bf16.msra.mxu0 0
      %527 = vmatprep.subr.bf16.mxu0 0
      %528 = vmatpush1.bf16.msra.mxu0 0
      %529 = vmatprep.subr.bf16.mxu0 0
      %530 = vmatpush1.bf16.msra.mxu0 0
      %531 = vmatprep.subr.bf16.mxu0 0
      %532 = vmatpush1.bf16.msra.mxu0 0
      %533 = vmatprep.subr.bf16.mxu0 0
      %534 = vmatpush1.bf16.msra.mxu0 0
      %535 = vmatprep.subr.bf16.mxu0 0
      %536 = vmatpush1.bf16.msra.mxu0 0
      %537 = vmatprep.subr.bf16.mxu0 0
      %538 = vmatpush1.bf16.msra.mxu0 0
      %539 = vmatprep.subr.bf16.mxu0 0
      %540 = vmatpush1.bf16.msra.mxu0 0
      %541 = vmatprep.subr.bf16.mxu0 0
      %542 = vmatpush1.bf16.msra.mxu0 0
      %543 = vmatprep.mubr.bf16.mxu0 0
      %544 = vmatmul.mubr.bf16.gmra.mrb[0].mxu0 %v499
      %v545 = vpop.f32.mrb[0].mxu0
      %v546 = vadd.f32 0.0, %v545
      %v547 = vpop.f32.mrb[0].mxu0
      %v548 = vadd.f32 0.0, %v547
      %v549 = vpop.f32.mrb[0].mxu0
      %v550 = vadd.f32 0.0, %v549
      %v551 = vpop.f32.mrb[0].mxu0
      %v552 = vadd.f32 0.0, %v551
      %553 = vdwg.mxu0
      %554 = vmatprep.subr.bf16.mxu0 0
      %555 = vmatpush1.bf16.msra.mxu0 %v509
      %556 = vmatprep.subr.bf16.mxu0 0
      %557 = vmatpush1.bf16.msra.mxu0 0
      %558 = vmatprep.subr.bf16.mxu0 0
      %559 = vmatpush1.bf16.msra.mxu0 0
      %560 = vmatprep.subr.bf16.mxu0 0
      %561 = vmatpush1.bf16.msra.mxu0 0
      %562 = vmatprep.subr.bf16.mxu0 0
      %563 = vmatpush1.bf16.msra.mxu0 0
      %564 = vmatprep.subr.bf16.mxu0 0
      %565 = vmatpush1.bf16.msra.mxu0 0
      %566 = vmatprep.subr.bf16.mxu0 0
      %567 = vmatpush1.bf16.msra.mxu0 0
      %568 = vmatprep.subr.bf16.mxu0 0
      %569 = vmatpush1.bf16.msra.mxu0 0
      %570 = vmatprep.subr.bf16.mxu0 0
      %571 = vmatpush1.bf16.msra.mxu0 0
      %572 = vmatprep.subr.bf16.mxu0 0
      %573 = vmatpush1.bf16.msra.mxu0 0
      %574 = vmatprep.subr.bf16.mxu0 0
      %575 = vmatpush1.bf16.msra.mxu0 0
      %576 = vmatprep.subr.bf16.mxu0 0
      %577 = vmatpush1.bf16.msra.mxu0 0
      %578 = vmatprep.subr.bf16.mxu0 0
      %579 = vmatpush1.bf16.msra.mxu0 0
      %580 = vmatprep.subr.bf16.mxu0 0
      %581 = vmatpush1.bf16.msra.mxu0 0
      %582 = vmatprep.subr.bf16.mxu0 0
      %583 = vmatpush1.bf16.msra.mxu0 0
      %584 = vmatprep.subr.bf16.mxu0 0
      %585 = vmatpush1.bf16.msra.mxu0 0
      %586 = vmatprep.mubr.bf16.mxu0 0
      %587 = vmatmul.mubr.bf16.gmra.mrb[0].mxu0 %v499
      %v588 = vpop.f32.mrb[0].mxu0
      %v589 = vadd.f32 0.0, %v588
      %v590 = vpop.f32.mrb[0].mxu0
      %v591 = vpop.f32.mrb[0].mxu0
      %v592 = vadd.f32 0.0, %v591
      %v593 = vpop.f32.mrb[0].mxu0
      %594 = vdwg.mxu0
      %v597 = vunpack.c.l.b16 %v475
      %v598 = vunpack.c.l.b16 %v476
      %v599 = vpack.c.b16 %v598, %v597
      %v601 = vsel %vm497, %v599, 0
      %v604 = vsel %vm501, %v469, 0
      %v607 = vsel %vm501, %v470, 0
      %v610 = vsel %vm501, %v471, 0
      %612 = vmatprep.subr.bf16.mxu0 %v607
      %613 = vmatpush1.bf16.msra.mxu0 %v604
      %614 = vmatprep.subr.bf16.mxu0 0
      %615 = vmatpush1.bf16.msra.mxu0 0
      %616 = vmatprep.subr.bf16.mxu0 0
      %617 = vmatpush1.bf16.msra.mxu0 0
      %618 = vmatprep.subr.bf16.mxu0 0
      %619 = vmatpush1.bf16.msra.mxu0 0
      %620 = vmatprep.subr.bf16.mxu0 0
      %621 = vmatpush1.bf16.msra.mxu0 0
      %622 = vmatprep.subr.bf16.mxu0 0
      %623 = vmatpush1.bf16.msra.mxu0 0
      %624 = vmatprep.subr.bf16.mxu0 0
      %625 = vmatpush1.bf16.msra.mxu0 0
      %626 = vmatprep.subr.bf16.mxu0 0
      %627 = vmatpush1.bf16.msra.mxu0 0
      %628 = vmatprep.subr.bf16.mxu0 0
      %629 = vmatpush1.bf16.msra.mxu0 0
      %630 = vmatprep.subr.bf16.mxu0 0
      %631 = vmatpush1.bf16.msra.mxu0 0
      %632 = vmatprep.subr.bf16.mxu0 0
      %633 = vmatpush1.bf16.msra.mxu0 0
      %634 = vmatprep.subr.bf16.mxu0 0
      %635 = vmatpush1.bf16.msra.mxu0 0
      %636 = vmatprep.subr.bf16.mxu0 0
      %637 = vmatpush1.bf16.msra.mxu0 0
      %638 = vmatprep.subr.bf16.mxu0 0
      %639 = vmatpush1.bf16.msra.mxu0 0
      %640 = vmatprep.subr.bf16.mxu0 0
      %641 = vmatpush1.bf16.msra.mxu0 0
      %642 = vmatprep.subr.bf16.mxu0 0
      %643 = vmatpush1.bf16.msra.mxu0 0
      %644 = vmatprep.mubr.bf16.mxu0 0
      %645 = vmatmul.mubr.bf16.gmra.mrb[0].mxu0 %v601
      %v646 = vpop.f32.mrb[0].mxu0
      %v647 = vadd.f32 %v546, %v646
      %v648 = vpop.f32.mrb[0].mxu0
      %v649 = vadd.f32 %v548, %v648
      %v650 = vpop.f32.mrb[0].mxu0
      %v651 = vadd.f32 %v550, %v650
      %v652 = vpop.f32.mrb[0].mxu0
      %v653 = vadd.f32 %v552, %v652
      %654 = vdwg.mxu0
      %655 = vmatprep.subr.bf16.mxu0 0
      %656 = vmatpush1.bf16.msra.mxu0 %v610
      %657 = vmatprep.subr.bf16.mxu0 0
      %658 = vmatpush1.bf16.msra.mxu0 0
      %659 = vmatprep.subr.bf16.mxu0 0
      %660 = vmatpush1.bf16.msra.mxu0 0
      %661 = vmatprep.subr.bf16.mxu0 0
      %662 = vmatpush1.bf16.msra.mxu0 0
      %663 = vmatprep.subr.bf16.mxu0 0
      %664 = vmatpush1.bf16.msra.mxu0 0
      %665 = vmatprep.subr.bf16.mxu0 0
      %666 = vmatpush1.bf16.msra.mxu0 0
      %667 = vmatprep.subr.bf16.mxu0 0
      %668 = vmatpush1.bf16.msra.mxu0 0
      %669 = vmatprep.subr.bf16.mxu0 0
      %670 = vmatpush1.bf16.msra.mxu0 0
      %671 = vmatprep.subr.bf16.mxu0 0
      %672 = vmatpush1.bf16.msra.mxu0 0
      %673 = vmatprep.subr.bf16.mxu0 0
      %674 = vmatpush1.bf16.msra.mxu0 0
      %675 = vmatprep.subr.bf16.mxu0 0
      %676 = vmatpush1.bf16.msra.mxu0 0
      %677 = vmatprep.subr.bf16.mxu0 0
      %678 = vmatpush1.bf16.msra.mxu0 0
      %679 = vmatprep.subr.bf16.mxu0 0
      %680 = vmatpush1.bf16.msra.mxu0 0
      %681 = vmatprep.subr.bf16.mxu0 0
      %682 = vmatpush1.bf16.msra.mxu0 0
      %683 = vmatprep.subr.bf16.mxu0 0
      %684 = vmatpush1.bf16.msra.mxu0 0
      %685 = vmatprep.subr.bf16.mxu0 0
      %686 = vmatpush1.bf16.msra.mxu0 0
      %687 = vmatprep.mubr.bf16.mxu0 0
      %688 = vmatmul.mubr.bf16.gmra.mrb[0].mxu0 %v601
      %v689 = vpop.f32.mrb[0].mxu0
      %v690 = vadd.f32 %v589, %v689
      %v691 = vpop.f32.mrb[0].mxu0
      %v692 = vpop.f32.mrb[0].mxu0
      %v693 = vadd.f32 %v592, %v692
      %v694 = vpop.f32.mrb[0].mxu0
      %695 = vdwg.mxu0
      %s696 = scalar_lea.vmem %s410, 16
      %v697 = vld [vmem:[%s696] sm:$0xf]
      %v698 = vld [vmem:[%s696 + $0x4] sm:$0xf]
      %v701 = vunpack.c.l.b16 %v697
      %v702 = vunpack.c.l.b16 %v698
      %v703 = vpack.c.b16 %v702, %v701
      %704 = vrot.lane.b32.xlu0 %v469, 126
      %v705 = vpop.permute.xlu0 %704
      %706 = vrot.lane.b32.xlu0 %v470, 126
      %v707 = vpop.permute.xlu0 %706
      %708 = vrot.lane.b32.xlu0 %v471, 126
      %v709 = vpop.permute.xlu0 %708
      %710 = vrot.lane.b32.xlu0 %v474, 126
      %v711 = vpop.permute.xlu0 %710
      %vm712 = vcmask 1031168
      %v713 = vsel %vm712, %v705, %v707
      %v714 = vsel %vm712, %v707, %v709
      %v715 = vsel %vm712, %v709, %v711
      %v717 = vsel %vm497, %v703, 0
      %v720 = vsel %vm501, %v713, 0
      %v723 = vsel %vm501, %v714, 0
      %v726 = vsel %vm501, %v715, 0
      %728 = vmatprep.subr.bf16.mxu0 %v723
      %729 = vmatpush1.bf16.msra.mxu0 %v720
      %730 = vmatprep.subr.bf16.mxu0 0
      %731 = vmatpush1.bf16.msra.mxu0 0
      %732 = vmatprep.subr.bf16.mxu0 0
      %733 = vmatpush1.bf16.msra.mxu0 0
      %734 = vmatprep.subr.bf16.mxu0 0
      %735 = vmatpush1.bf16.msra.mxu0 0
      %736 = vmatprep.subr.bf16.mxu0 0
      %737 = vmatpush1.bf16.msra.mxu0 0
      %738 = vmatprep.subr.bf16.mxu0 0
      %739 = vmatpush1.bf16.msra.mxu0 0
      %740 = vmatprep.subr.bf16.mxu0 0
      %741 = vmatpush1.bf16.msra.mxu0 0
      %742 = vmatprep.subr.bf16.mxu0 0
      %743 = vmatpush1.bf16.msra.mxu0 0
      %744 = vmatprep.subr.bf16.mxu0 0
      %745 = vmatpush1.bf16.msra.mxu0 0
      %746 = vmatprep.subr.bf16.mxu0 0
      %747 = vmatpush1.bf16.msra.mxu0 0
      %748 = vmatprep.subr.bf16.mxu0 0
      %749 = vmatpush1.bf16.msra.mxu0 0
      %750 = vmatprep.subr.bf16.mxu0 0
      %751 = vmatpush1.bf16.msra.mxu0 0
      %752 = vmatprep.subr.bf16.mxu0 0
      %753 = vmatpush1.bf16.msra.mxu0 0
      %754 = vmatprep.subr.bf16.mxu0 0
      %755 = vmatpush1.bf16.msra.mxu0 0
      %756 = vmatprep.subr.bf16.mxu0 0
      %757 = vmatpush1.bf16.msra.mxu0 0
      %758 = vmatprep.subr.bf16.mxu0 0
      %759 = vmatpush1.bf16.msra.mxu0 0
      %760 = vmatprep.mubr.bf16.mxu0 0
      %761 = vmatmul.mubr.bf16.gmra.mrb[0].mxu0 %v717
      %v762 = vpop.f32.mrb[0].mxu0
      %v763 = vadd.f32 0.0, %v762
      %v764 = vpop.f32.mrb[0].mxu0
      %v765 = vadd.f32 0.0, %v764
      %v766 = vpop.f32.mrb[0].mxu0
      %v767 = vadd.f32 0.0, %v766
      %v768 = vpop.f32.mrb[0].mxu0
      %v769 = vadd.f32 0.0, %v768
      %770 = vdwg.mxu0
      %771 = vmatprep.subr.bf16.mxu0 0
      %772 = vmatpush1.bf16.msra.mxu0 %v726
      %773 = vmatprep.subr.bf16.mxu0 0
      %774 = vmatpush1.bf16.msra.mxu0 0
      %775 = vmatprep.subr.bf16.mxu0 0
      %776 = vmatpush1.bf16.msra.mxu0 0
      %777 = vmatprep.subr.bf16.mxu0 0
      %778 = vmatpush1.bf16.msra.mxu0 0
      %779 = vmatprep.subr.bf16.mxu0 0
      %780 = vmatpush1.bf16.msra.mxu0 0
      %781 = vmatprep.subr.bf16.mxu0 0
      %782 = vmatpush1.bf16.msra.mxu0 0
      %783 = vmatprep.subr.bf16.mxu0 0
      %784 = vmatpush1.bf16.msra.mxu0 0
      %785 = vmatprep.subr.bf16.mxu0 0
      %786 = vmatpush1.bf16.msra.mxu0 0
      %787 = vmatprep.subr.bf16.mxu0 0
      %788 = vmatpush1.bf16.msra.mxu0 0
      %789 = vmatprep.subr.bf16.mxu0 0
      %790 = vmatpush1.bf16.msra.mxu0 0
      %791 = vmatprep.subr.bf16.mxu0 0
      %792 = vmatpush1.bf16.msra.mxu0 0
      %793 = vmatprep.subr.bf16.mxu0 0
      %794 = vmatpush1.bf16.msra.mxu0 0
      %795 = vmatprep.subr.bf16.mxu0 0
      %796 = vmatpush1.bf16.msra.mxu0 0
      %797 = vmatprep.subr.bf16.mxu0 0
      %798 = vmatpush1.bf16.msra.mxu0 0
      %799 = vmatprep.subr.bf16.mxu0 0
      %800 = vmatpush1.bf16.msra.mxu0 0
      %801 = vmatprep.subr.bf16.mxu0 0
      %802 = vmatpush1.bf16.msra.mxu0 0
      %803 = vmatprep.mubr.bf16.mxu0 0
      %804 = vmatmul.mubr.bf16.gmra.mrb[0].mxu0 %v717
      %v805 = vpop.f32.mrb[0].mxu0
      %v806 = vadd.f32 0.0, %v805
      %v807 = vpop.f32.mrb[0].mxu0
      %v808 = vpop.f32.mrb[0].mxu0
      %v809 = vadd.f32 0.0, %v808
      %v810 = vpop.f32.mrb[0].mxu0
      %811 = vdwg.mxu0
      %v812 = vadd.f32 %v647, %v763
      %v813 = vadd.f32 %v649, %v765
      %v814 = vadd.f32 %v690, %v806
      %v815 = vadd.f32 %v651, %v767
      %v816 = vadd.f32 %v653, %v769
      %v817 = vadd.f32 %v693, %v809
      %s818 = scalar_lea.vmem %s410, 24
      %v819 = vld [vmem:[%s818] sm:$0xf]
      %v820 = vld [vmem:[%s818 + $0x4] sm:$0xf]
      %v823 = vunpack.c.l.b16 %v819
      %v824 = vunpack.c.l.b16 %v820
      %v825 = vpack.c.b16 %v824, %v823
      %826 = vrot.lane.b32.xlu0 %v469, 110
      %v827 = vpop.permute.xlu0 %826
      %828 = vrot.lane.b32.xlu0 %v470, 110
      %v829 = vpop.permute.xlu0 %828
      %830 = vrot.lane.b32.xlu0 %v471, 110
      %v831 = vpop.permute.xlu0 %830
      %832 = vrot.lane.b32.xlu0 %v474, 110
      %v833 = vpop.permute.xlu0 %832
      %vm834 = vcmask 900096
      %v835 = vsel %vm834, %v827, %v829
      %v836 = vsel %vm834, %v829, %v831
      %v837 = vsel %vm834, %v831, %v833
      %v839 = vsel %vm497, %v825, 0
      %v842 = vsel %vm501, %v835, 0
      %v845 = vsel %vm501, %v836, 0
      %v848 = vsel %vm501, %v837, 0
      %850 = vmatprep.subr.bf16.mxu0 %v845
      %851 = vmatpush1.bf16.msra.mxu0 %v842
      %852 = vmatprep.subr.bf16.mxu0 0
      %853 = vmatpush1.bf16.msra.mxu0 0
      %854 = vmatprep.subr.bf16.mxu0 0
      %855 = vmatpush1.bf16.msra.mxu0 0
      %856 = vmatprep.subr.bf16.mxu0 0
      %857 = vmatpush1.bf16.msra.mxu0 0
      %858 = vmatprep.subr.bf16.mxu0 0
      %859 = vmatpush1.bf16.msra.mxu0 0
      %860 = vmatprep.subr.bf16.mxu0 0
      %861 = vmatpush1.bf16.msra.mxu0 0
      %862 = vmatprep.subr.bf16.mxu0 0
      %863 = vmatpush1.bf16.msra.mxu0 0
      %864 = vmatprep.subr.bf16.mxu0 0
      %865 = vmatpush1.bf16.msra.mxu0 0
      %866 = vmatprep.subr.bf16.mxu0 0
      %867 = vmatpush1.bf16.msra.mxu0 0
      %868 = vmatprep.subr.bf16.mxu0 0
      %869 = vmatpush1.bf16.msra.mxu0 0
      %870 = vmatprep.subr.bf16.mxu0 0
      %871 = vmatpush1.bf16.msra.mxu0 0
      %872 = vmatprep.subr.bf16.mxu0 0
      %873 = vmatpush1.bf16.msra.mxu0 0
      %874 = vmatprep.subr.bf16.mxu0 0
      %875 = vmatpush1.bf16.msra.mxu0 0
      %876 = vmatprep.subr.bf16.mxu0 0
      %877 = vmatpush1.bf16.msra.mxu0 0
      %878 = vmatprep.subr.bf16.mxu0 0
      %879 = vmatpush1.bf16.msra.mxu0 0
      %880 = vmatprep.subr.bf16.mxu0 0
      %881 = vmatpush1.bf16.msra.mxu0 0
      %882 = vmatprep.mubr.bf16.mxu0 0
      %883 = vmatmul.mubr.bf16.gmra.mrb[0].mxu0 %v839
      %v884 = vpop.f32.mrb[0].mxu0
      %v885 = vadd.f32 0.0, %v884
      %v886 = vpop.f32.mrb[0].mxu0
      %v887 = vadd.f32 0.0, %v886
      %v888 = vpop.f32.mrb[0].mxu0
      %v889 = vadd.f32 0.0, %v888
      %v890 = vpop.f32.mrb[0].mxu0
      %v891 = vadd.f32 0.0, %v890
      %892 = vdwg.mxu0
      %893 = vmatprep.subr.bf16.mxu0 0
      %894 = vmatpush1.bf16.msra.mxu0 %v848
      %895 = vmatprep.subr.bf16.mxu0 0
      %896 = vmatpush1.bf16.msra.mxu0 0
      %897 = vmatprep.subr.bf16.mxu0 0
      %898 = vmatpush1.bf16.msra.mxu0 0
      %899 = vmatprep.subr.bf16.mxu0 0
      %900 = vmatpush1.bf16.msra.mxu0 0
      %901 = vmatprep.subr.bf16.mxu0 0
      %902 = vmatpush1.bf16.msra.mxu0 0
      %903 = vmatprep.subr.bf16.mxu0 0
      %904 = vmatpush1.bf16.msra.mxu0 0
      %905 = vmatprep.subr.bf16.mxu0 0
      %906 = vmatpush1.bf16.msra.mxu0 0
      %907 = vmatprep.subr.bf16.mxu0 0
      %908 = vmatpush1.bf16.msra.mxu0 0
      %909 = vmatprep.subr.bf16.mxu0 0
      %910 = vmatpush1.bf16.msra.mxu0 0
      %911 = vmatprep.subr.bf16.mxu0 0
      %912 = vmatpush1.bf16.msra.mxu0 0
      %913 = vmatprep.subr.bf16.mxu0 0
      %914 = vmatpush1.bf16.msra.mxu0 0
      %915 = vmatprep.subr.bf16.mxu0 0
      %916 = vmatpush1.bf16.msra.mxu0 0
      %917 = vmatprep.subr.bf16.mxu0 0
      %918 = vmatpush1.bf16.msra.mxu0 0
      %919 = vmatprep.subr.bf16.mxu0 0
      %920 = vmatpush1.bf16.msra.mxu0 0
      %921 = vmatprep.subr.bf16.mxu0 0
      %922 = vmatpush1.bf16.msra.mxu0 0
      %923 = vmatprep.subr.bf16.mxu0 0
      %924 = vmatpush1.bf16.msra.mxu0 0
      %925 = vmatprep.mubr.bf16.mxu0 0
      %926 = vmatmul.mubr.bf16.gmra.mrb[0].mxu0 %v839
      %v927 = vpop.f32.mrb[0].mxu0
      %v928 = vadd.f32 0.0, %v927
      %v929 = vpop.f32.mrb[0].mxu0
      %v930 = vpop.f32.mrb[0].mxu0
      %v931 = vadd.f32 0.0, %v930
      %v932 = vpop.f32.mrb[0].mxu0
      %933 = vdwg.mxu0
      %v934 = vadd.f32 %v812, %v885
      %v935 = vadd.f32 %v813, %v887
      %v936 = vadd.f32 %v814, %v928
      %v937 = vadd.f32 %v815, %v889
      %v938 = vadd.f32 %v816, %v891
      %v939 = vadd.f32 %v817, %v931
      %s940 = scalar_lea.vmem %s410, 32
      %v941 = vld [vmem:[%s940] sm:$0xf]
      %v942 = vld [vmem:[%s940 + $0x4] sm:$0xf]
      %v945 = vunpack.c.l.b16 %v941
      %v946 = vunpack.c.l.b16 %v942
      %v947 = vpack.c.b16 %v946, %v945
      %948 = vrot.lane.b32.xlu0 %v469, 109
      %v949 = vpop.permute.xlu0 %948
      %950 = vrot.lane.b32.xlu0 %v470, 109
      %v951 = vpop.permute.xlu0 %950
      %952 = vrot.lane.b32.xlu0 %v471, 109
      %v953 = vpop.permute.xlu0 %952
      %954 = vrot.lane.b32.xlu0 %v474, 109
      %v955 = vpop.permute.xlu0 %954
      %vm956 = vcmask 891904
      %v957 = vsel %vm956, %v949, %v951
      %v958 = vsel %vm956, %v951, %v953
      %v959 = vsel %vm956, %v953, %v955
      %v961 = vsel %vm497, %v947, 0
      %v964 = vsel %vm501, %v957, 0
      %v967 = vsel %vm501, %v958, 0
      %v970 = vsel %vm501, %v959, 0
      %972 = vmatprep.subr.bf16.mxu0 %v967
      %973 = vmatpush1.bf16.msra.mxu0 %v964
      %974 = vmatprep.subr.bf16.mxu0 0
      %975 = vmatpush1.bf16.msra.mxu0 0
      %976 = vmatprep.subr.bf16.mxu0 0
      %977 = vmatpush1.bf16.msra.mxu0 0
      %978 = vmatprep.subr.bf16.mxu0 0
      %979 = vmatpush1.bf16.msra.mxu0 0
      %980 = vmatprep.subr.bf16.mxu0 0
      %981 = vmatpush1.bf16.msra.mxu0 0
      %982 = vmatprep.subr.bf16.mxu0 0
      %983 = vmatpush1.bf16.msra.mxu0 0
      %984 = vmatprep.subr.bf16.mxu0 0
      %985 = vmatpush1.bf16.msra.mxu0 0
      %986 = vmatprep.subr.bf16.mxu0 0
      %987 = vmatpush1.bf16.msra.mxu0 0
      %988 = vmatprep.subr.bf16.mxu0 0
      %989 = vmatpush1.bf16.msra.mxu0 0
      %990 = vmatprep.subr.bf16.mxu0 0
      %991 = vmatpush1.bf16.msra.mxu0 0
      %992 = vmatprep.subr.bf16.mxu0 0
      %993 = vmatpush1.bf16.msra.mxu0 0
      %994 = vmatprep.subr.bf16.mxu0 0
      %995 = vmatpush1.bf16.msra.mxu0 0
      %996 = vmatprep.subr.bf16.mxu0 0
      %997 = vmatpush1.bf16.msra.mxu0 0
      %998 = vmatprep.subr.bf16.mxu0 0
      %999 = vmatpush1.bf16.msra.mxu0 0
      %1000 = vmatprep.subr.bf16.mxu0 0
      %1001 = vmatpush1.bf16.msra.mxu0 0
      %1002 = vmatprep.subr.bf16.mxu0 0
      %1003 = vmatpush1.bf16.msra.mxu0 0
      %1004 = vmatprep.mubr.bf16.mxu0 0
      %1005 = vmatmul.mubr.bf16.gmra.mrb[0].mxu0 %v961
      %v1006 = vpop.f32.mrb[0].mxu0
      %v1007 = vadd.f32 0.0, %v1006
      %v1008 = vpop.f32.mrb[0].mxu0
      %v1009 = vadd.f32 0.0, %v1008
      %v1010 = vpop.f32.mrb[0].mxu0
      %v1011 = vadd.f32 0.0, %v1010
      %v1012 = vpop.f32.mrb[0].mxu0
      %v1013 = vadd.f32 0.0, %v1012
      %1014 = vdwg.mxu0
      %1015 = vmatprep.subr.bf16.mxu0 0
      %1016 = vmatpush1.bf16.msra.mxu0 %v970
      %1017 = vmatprep.subr.bf16.mxu0 0
      %1018 = vmatpush1.bf16.msra.mxu0 0
      %1019 = vmatprep.subr.bf16.mxu0 0
      %1020 = vmatpush1.bf16.msra.mxu0 0
      %1021 = vmatprep.subr.bf16.mxu0 0
      %1022 = vmatpush1.bf16.msra.mxu0 0
      %1023 = vmatprep.subr.bf16.mxu0 0
      %1024 = vmatpush1.bf16.msra.mxu0 0
      %1025 = vmatprep.subr.bf16.mxu0 0
      %1026 = vmatpush1.bf16.msra.mxu0 0
      %1027 = vmatprep.subr.bf16.mxu0 0
      %1028 = vmatpush1.bf16.msra.mxu0 0
      %1029 = vmatprep.subr.bf16.mxu0 0
      %1030 = vmatpush1.bf16.msra.mxu0 0
      %1031 = vmatprep.subr.bf16.mxu0 0
      %1032 = vmatpush1.bf16.msra.mxu0 0
      %1033 = vmatprep.subr.bf16.mxu0 0
      %1034 = vmatpush1.bf16.msra.mxu0 0
      %1035 = vmatprep.subr.bf16.mxu0 0
      %1036 = vmatpush1.bf16.msra.mxu0 0
      %1037 = vmatprep.subr.bf16.mxu0 0
      %1038 = vmatpush1.bf16.msra.mxu0 0
      %1039 = vmatprep.subr.bf16.mxu0 0
      %1040 = vmatpush1.bf16.msra.mxu0 0
      %1041 = vmatprep.subr.bf16.mxu0 0
      %1042 = vmatpush1.bf16.msra.mxu0 0
      %1043 = vmatprep.subr.bf16.mxu0 0
      %1044 = vmatpush1.bf16.msra.mxu0 0
      %1045 = vmatprep.subr.bf16.mxu0 0
      %1046 = vmatpush1.bf16.msra.mxu0 0
      %1047 = vmatprep.mubr.bf16.mxu0 0
      %1048 = vmatmul.mubr.bf16.gmra.mrb[0].mxu0 %v961
      %v1049 = vpop.f32.mrb[0].mxu0
      %v1050 = vadd.f32 0.0, %v1049
      %v1051 = vpop.f32.mrb[0].mxu0
      %v1052 = vpop.f32.mrb[0].mxu0
      %v1053 = vadd.f32 0.0, %v1052
      %v1054 = vpop.f32.mrb[0].mxu0
      %1055 = vdwg.mxu0
      %v1056 = vadd.f32 %v934, %v1007
      %v1057 = vadd.f32 %v935, %v1009
      %v1058 = vadd.f32 %v936, %v1050
      %v1059 = vadd.f32 %v937, %v1011
      %v1060 = vadd.f32 %v938, %v1013
      %v1061 = vadd.f32 %v939, %v1053
      %s1062 = scalar_lea.vmem %s410, 40
      %v1063 = vld [vmem:[%s1062] sm:$0xf]
      %v1064 = vld [vmem:[%s1062 + $0x4] sm:$0xf]
      %v1067 = vunpack.c.l.b16 %v1063
      %v1068 = vunpack.c.l.b16 %v1064
      %v1069 = vpack.c.b16 %v1068, %v1067
      %1070 = vrot.lane.b32.xlu0 %v469, 108
      %v1071 = vpop.permute.xlu0 %1070
      %1072 = vrot.lane.b32.xlu0 %v470, 108
      %v1073 = vpop.permute.xlu0 %1072
      %1074 = vrot.lane.b32.xlu0 %v471, 108
      %v1075 = vpop.permute.xlu0 %1074
      %1076 = vrot.lane.b32.xlu0 %v474, 108
      %v1077 = vpop.permute.xlu0 %1076
      %vm1078 = vcmask 883712
      %v1079 = vsel %vm1078, %v1071, %v1073
      %v1080 = vsel %vm1078, %v1073, %v1075
      %v1081 = vsel %vm1078, %v1075, %v1077
      %v1083 = vsel %vm497, %v1069, 0
      %v1086 = vsel %vm501, %v1079, 0
      %v1089 = vsel %vm501, %v1080, 0
      %v1092 = vsel %vm501, %v1081, 0
      %1094 = vmatprep.subr.bf16.mxu0 %v1089
      %1095 = vmatpush1.bf16.msra.mxu0 %v1086
      %1096 = vmatprep.subr.bf16.mxu0 0
      %1097 = vmatpush1.bf16.msra.mxu0 0
      %1098 = vmatprep.subr.bf16.mxu0 0
      %1099 = vmatpush1.bf16.msra.mxu0 0
      %1100 = vmatprep.subr.bf16.mxu0 0
      %1101 = vmatpush1.bf16.msra.mxu0 0
      %1102 = vmatprep.subr.bf16.mxu0 0
      %1103 = vmatpush1.bf16.msra.mxu0 0
      %1104 = vmatprep.subr.bf16.mxu0 0
      %1105 = vmatpush1.bf16.msra.mxu0 0
      %1106 = vmatprep.subr.bf16.mxu0 0
      %1107 = vmatpush1.bf16.msra.mxu0 0
      %1108 = vmatprep.subr.bf16.mxu0 0
      %1109 = vmatpush1.bf16.msra.mxu0 0
      %1110 = vmatprep.subr.bf16.mxu0 0
      %1111 = vmatpush1.bf16.msra.mxu0 0
      %1112 = vmatprep.subr.bf16.mxu0 0
      %1113 = vmatpush1.bf16.msra.mxu0 0
      %1114 = vmatprep.subr.bf16.mxu0 0
      %1115 = vmatpush1.bf16.msra.mxu0 0
      %1116 = vmatprep.subr.bf16.mxu0 0
      %1117 = vmatpush1.bf16.msra.mxu0 0
      %1118 = vmatprep.subr.bf16.mxu0 0
      %1119 = vmatpush1.bf16.msra.mxu0 0
      %1120 = vmatprep.subr.bf16.mxu0 0
      %1121 = vmatpush1.bf16.msra.mxu0 0
      %1122 = vmatprep.subr.bf16.mxu0 0
      %1123 = vmatpush1.bf16.msra.mxu0 0
      %1124 = vmatprep.subr.bf16.mxu0 0
      %1125 = vmatpush1.bf16.msra.mxu0 0
      %1126 = vmatprep.mubr.bf16.mxu0 0
      %1127 = vmatmul.mubr.bf16.gmra.mrb[0].mxu0 %v1083
      %v1128 = vpop.f32.mrb[0].mxu0
      %v1129 = vadd.f32 0.0, %v1128
      %v1130 = vpop.f32.mrb[0].mxu0
      %v1131 = vadd.f32 0.0, %v1130
      %v1132 = vpop.f32.mrb[0].mxu0
      %v1133 = vadd.f32 0.0, %v1132
      %v1134 = vpop.f32.mrb[0].mxu0
      %v1135 = vadd.f32 0.0, %v1134
      %1136 = vdwg.mxu0
      %1137 = vmatprep.subr.bf16.mxu0 0
      %1138 = vmatpush1.bf16.msra.mxu0 %v1092
      %1139 = vmatprep.subr.bf16.mxu0 0
      %1140 = vmatpush1.bf16.msra.mxu0 0
      %1141 = vmatprep.subr.bf16.mxu0 0
      %1142 = vmatpush1.bf16.msra.mxu0 0
      %1143 = vmatprep.subr.bf16.mxu0 0
      %1144 = vmatpush1.bf16.msra.mxu0 0
      %1145 = vmatprep.subr.bf16.mxu0 0
      %1146 = vmatpush1.bf16.msra.mxu0 0
      %1147 = vmatprep.subr.bf16.mxu0 0
      %1148 = vmatpush1.bf16.msra.mxu0 0
      %1149 = vmatprep.subr.bf16.mxu0 0
      %1150 = vmatpush1.bf16.msra.mxu0 0
      %1151 = vmatprep.subr.bf16.mxu0 0
      %1152 = vmatpush1.bf16.msra.mxu0 0
      %1153 = vmatprep.subr.bf16.mxu0 0
      %1154 = vmatpush1.bf16.msra.mxu0 0
      %1155 = vmatprep.subr.bf16.mxu0 0
      %1156 = vmatpush1.bf16.msra.mxu0 0
      %1157 = vmatprep.subr.bf16.mxu0 0
      %1158 = vmatpush1.bf16.msra.mxu0 0
      %1159 = vmatprep.subr.bf16.mxu0 0
      %1160 = vmatpush1.bf16.msra.mxu0 0
      %1161 = vmatprep.subr.bf16.mxu0 0
      %1162 = vmatpush1.bf16.msra.mxu0 0
      %1163 = vmatprep.subr.bf16.mxu0 0
      %1164 = vmatpush1.bf16.msra.mxu0 0
      %1165 = vmatprep.subr.bf16.mxu0 0
      %1166 = vmatpush1.bf16.msra.mxu0 0
      %1167 = vmatprep.subr.bf16.mxu0 0
      %1168 = vmatpush1.bf16.msra.mxu0 0
      %1169 = vmatprep.mubr.bf16.mxu0 0
      %1170 = vmatmul.mubr.bf16.gmra.mrb[0].mxu0 %v1083
      %v1171 = vpop.f32.mrb[0].mxu0
      %v1172 = vadd.f32 0.0, %v1171
      %v1173 = vpop.f32.mrb[0].mxu0
      %v1174 = vpop.f32.mrb[0].mxu0
      %v1175 = vadd.f32 0.0, %v1174
      %v1176 = vpop.f32.mrb[0].mxu0
      %1177 = vdwg.mxu0
      %v1178 = vadd.f32 %v1056, %v1129
      %v1179 = vadd.f32 %v1057, %v1131
      %v1180 = vadd.f32 %v1058, %v1172
      %v1181 = vadd.f32 %v1059, %v1133
      %v1182 = vadd.f32 %v1060, %v1135
      %v1183 = vadd.f32 %v1061, %v1175
      %s1184 = scalar_lea.vmem %s410, 48
      %v1185 = vld [vmem:[%s1184] sm:$0xf]
      %v1186 = vld [vmem:[%s1184 + $0x4] sm:$0xf]
      %v1189 = vunpack.c.l.b16 %v1185
      %v1190 = vunpack.c.l.b16 %v1186
      %v1191 = vpack.c.b16 %v1190, %v1189
      %1192 = vrot.lane.b32.xlu0 %v469, 92
      %v1193 = vpop.permute.xlu0 %1192
      %1194 = vrot.lane.b32.xlu0 %v470, 92
      %v1195 = vpop.permute.xlu0 %1194
      %1196 = vrot.lane.b32.xlu0 %v471, 92
      %v1197 = vpop.permute.xlu0 %1196
      %1198 = vrot.lane.b32.xlu0 %v474, 92
      %v1199 = vpop.permute.xlu0 %1198
      %vm1200 = vcmask 752640
      %v1201 = vsel %vm1200, %v1193, %v1195
      %v1202 = vsel %vm1200, %v1195, %v1197
      %v1203 = vsel %vm1200, %v1197, %v1199
      %v1205 = vsel %vm497, %v1191, 0
      %v1208 = vsel %vm501, %v1201, 0
      %v1211 = vsel %vm501, %v1202, 0
      %v1214 = vsel %vm501, %v1203, 0
      %1216 = vmatprep.subr.bf16.mxu0 %v1211
      %1217 = vmatpush1.bf16.msra.mxu0 %v1208
      %1218 = vmatprep.subr.bf16.mxu0 0
      %1219 = vmatpush1.bf16.msra.mxu0 0
      %1220 = vmatprep.subr.bf16.mxu0 0
      %1221 = vmatpush1.bf16.msra.mxu0 0
      %1222 = vmatprep.subr.bf16.mxu0 0
      %1223 = vmatpush1.bf16.msra.mxu0 0
      %1224 = vmatprep.subr.bf16.mxu0 0
      %1225 = vmatpush1.bf16.msra.mxu0 0
      %1226 = vmatprep.subr.bf16.mxu0 0
      %1227 = vmatpush1.bf16.msra.mxu0 0
      %1228 = vmatprep.subr.bf16.mxu0 0
      %1229 = vmatpush1.bf16.msra.mxu0 0
      %1230 = vmatprep.subr.bf16.mxu0 0
      %1231 = vmatpush1.bf16.msra.mxu0 0
      %1232 = vmatprep.subr.bf16.mxu0 0
      %1233 = vmatpush1.bf16.msra.mxu0 0
      %1234 = vmatprep.subr.bf16.mxu0 0
      %1235 = vmatpush1.bf16.msra.mxu0 0
      %1236 = vmatprep.subr.bf16.mxu0 0
      %1237 = vmatpush1.bf16.msra.mxu0 0
      %1238 = vmatprep.subr.bf16.mxu0 0
      %1239 = vmatpush1.bf16.msra.mxu0 0
      %1240 = vmatprep.subr.bf16.mxu0 0
      %1241 = vmatpush1.bf16.msra.mxu0 0
      %1242 = vmatprep.subr.bf16.mxu0 0
      %1243 = vmatpush1.bf16.msra.mxu0 0
      %1244 = vmatprep.subr.bf16.mxu0 0
      %1245 = vmatpush1.bf16.msra.mxu0 0
      %1246 = vmatprep.subr.bf16.mxu0 0
      %1247 = vmatpush1.bf16.msra.mxu0 0
      %1248 = vmatprep.mubr.bf16.mxu0 0
      %1249 = vmatmul.mubr.bf16.gmra.mrb[0].mxu0 %v1205
      %v1250 = vpop.f32.mrb[0].mxu0
      %v1251 = vadd.f32 0.0, %v1250
      %v1252 = vpop.f32.mrb[0].mxu0
      %v1253 = vadd.f32 0.0, %v1252
      %v1254 = vpop.f32.mrb[0].mxu0
      %v1255 = vadd.f32 0.0, %v1254
      %v1256 = vpop.f32.mrb[0].mxu0
      %v1257 = vadd.f32 0.0, %v1256
      %1258 = vdwg.mxu0
      %1259 = vmatprep.subr.bf16.mxu0 0
      %1260 = vmatpush1.bf16.msra.mxu0 %v1214
      %1261 = vmatprep.subr.bf16.mxu0 0
      %1262 = vmatpush1.bf16.msra.mxu0 0
      %1263 = vmatprep.subr.bf16.mxu0 0
      %1264 = vmatpush1.bf16.msra.mxu0 0
      %1265 = vmatprep.subr.bf16.mxu0 0
      %1266 = vmatpush1.bf16.msra.mxu0 0
      %1267 = vmatprep.subr.bf16.mxu0 0
      %1268 = vmatpush1.bf16.msra.mxu0 0
      %1269 = vmatprep.subr.bf16.mxu0 0
      %1270 = vmatpush1.bf16.msra.mxu0 0
      %1271 = vmatprep.subr.bf16.mxu0 0
      %1272 = vmatpush1.bf16.msra.mxu0 0
      %1273 = vmatprep.subr.bf16.mxu0 0
      %1274 = vmatpush1.bf16.msra.mxu0 0
      %1275 = vmatprep.subr.bf16.mxu0 0
      %1276 = vmatpush1.bf16.msra.mxu0 0
      %1277 = vmatprep.subr.bf16.mxu0 0
      %1278 = vmatpush1.bf16.msra.mxu0 0
      %1279 = vmatprep.subr.bf16.mxu0 0
      %1280 = vmatpush1.bf16.msra.mxu0 0
      %1281 = vmatprep.subr.bf16.mxu0 0
      %1282 = vmatpush1.bf16.msra.mxu0 0
      %1283 = vmatprep.subr.bf16.mxu0 0
      %1284 = vmatpush1.bf16.msra.mxu0 0
      %1285 = vmatprep.subr.bf16.mxu0 0
      %1286 = vmatpush1.bf16.msra.mxu0 0
      %1287 = vmatprep.subr.bf16.mxu0 0
      %1288 = vmatpush1.bf16.msra.mxu0 0
      %1289 = vmatprep.subr.bf16.mxu0 0
      %1290 = vmatpush1.bf16.msra.mxu0 0
      %1291 = vmatprep.mubr.bf16.mxu0 0
      %1292 = vmatmul.mubr.bf16.gmra.mrb[0].mxu0 %v1205
      %v1293 = vpop.f32.mrb[0].mxu0
      %v1294 = vadd.f32 0.0, %v1293
      %v1295 = vpop.f32.mrb[0].mxu0
      %v1296 = vpop.f32.mrb[0].mxu0
      %v1297 = vadd.f32 0.0, %v1296
      %v1298 = vpop.f32.mrb[0].mxu0
      %1299 = vdwg.mxu0
      %v1300 = vadd.f32 %v1178, %v1251
      %v1301 = vadd.f32 %v1179, %v1253
      %v1302 = vadd.f32 %v1180, %v1294
      %v1303 = vadd.f32 %v1181, %v1255
      %v1304 = vadd.f32 %v1182, %v1257
      %v1305 = vadd.f32 %v1183, %v1297
      %s1306 = scalar_lea.vmem %s410, 56
      %v1307 = vld [vmem:[%s1306] sm:$0xf]
      %v1308 = vld [vmem:[%s1306 + $0x4] sm:$0xf]
      %v1311 = vunpack.c.l.b16 %v1307
      %v1312 = vunpack.c.l.b16 %v1308
      %v1313 = vpack.c.b16 %v1312, %v1311
      %1314 = vrot.lane.b32.xlu0 %v469, 91
      %v1315 = vpop.permute.xlu0 %1314
      %1316 = vrot.lane.b32.xlu0 %v470, 91
      %v1317 = vpop.permute.xlu0 %1316
      %1318 = vrot.lane.b32.xlu0 %v471, 91
      %v1319 = vpop.permute.xlu0 %1318
      %1320 = vrot.lane.b32.xlu0 %v474, 91
      %v1321 = vpop.permute.xlu0 %1320
      %vm1322 = vcmask 744448
      %v1323 = vsel %vm1322, %v1315, %v1317
      %v1324 = vsel %vm1322, %v1317, %v1319
      %v1325 = vsel %vm1322, %v1319, %v1321
      %v1327 = vsel %vm497, %v1313, 0
      %v1330 = vsel %vm501, %v1323, 0
      %v1333 = vsel %vm501, %v1324, 0
      %v1336 = vsel %vm501, %v1325, 0
      %1338 = vmatprep.subr.bf16.mxu0 %v1333
      %1339 = vmatpush1.bf16.msra.mxu0 %v1330
      %1340 = vmatprep.subr.bf16.mxu0 0
      %1341 = vmatpush1.bf16.msra.mxu0 0
      %1342 = vmatprep.subr.bf16.mxu0 0
      %1343 = vmatpush1.bf16.msra.mxu0 0
      %1344 = vmatprep.subr.bf16.mxu0 0
      %1345 = vmatpush1.bf16.msra.mxu0 0
      %1346 = vmatprep.subr.bf16.mxu0 0
      %1347 = vmatpush1.bf16.msra.mxu0 0
      %1348 = vmatprep.subr.bf16.mxu0 0
      %1349 = vmatpush1.bf16.msra.mxu0 0
      %1350 = vmatprep.subr.bf16.mxu0 0
      %1351 = vmatpush1.bf16.msra.mxu0 0
      %1352 = vmatprep.subr.bf16.mxu0 0
      %1353 = vmatpush1.bf16.msra.mxu0 0
      %1354 = vmatprep.subr.bf16.mxu0 0
      %1355 = vmatpush1.bf16.msra.mxu0 0
      %1356 = vmatprep.subr.bf16.mxu0 0
      %1357 = vmatpush1.bf16.msra.mxu0 0
      %1358 = vmatprep.subr.bf16.mxu0 0
      %1359 = vmatpush1.bf16.msra.mxu0 0
      %1360 = vmatprep.subr.bf16.mxu0 0
      %1361 = vmatpush1.bf16.msra.mxu0 0
      %1362 = vmatprep.subr.bf16.mxu0 0
      %1363 = vmatpush1.bf16.msra.mxu0 0
      %1364 = vmatprep.subr.bf16.mxu0 0
      %1365 = vmatpush1.bf16.msra.mxu0 0
      %1366 = vmatprep.subr.bf16.mxu0 0
      %1367 = vmatpush1.bf16.msra.mxu0 0
      %1368 = vmatprep.subr.bf16.mxu0 0
      %1369 = vmatpush1.bf16.msra.mxu0 0
      %1370 = vmatprep.mubr.bf16.mxu0 0
      %1371 = vmatmul.mubr.bf16.gmra.mrb[0].mxu0 %v1327
      %v1372 = vpop.f32.mrb[0].mxu0
      %v1373 = vadd.f32 0.0, %v1372
      %v1374 = vpop.f32.mrb[0].mxu0
      %v1375 = vadd.f32 0.0, %v1374
      %v1376 = vpop.f32.mrb[0].mxu0
      %v1377 = vadd.f32 0.0, %v1376
      %v1378 = vpop.f32.mrb[0].mxu0
      %v1379 = vadd.f32 0.0, %v1378
      %1380 = vdwg.mxu0
      %1381 = vmatprep.subr.bf16.mxu0 0
      %1382 = vmatpush1.bf16.msra.mxu0 %v1336
      %1383 = vmatprep.subr.bf16.mxu0 0
      %1384 = vmatpush1.bf16.msra.mxu0 0
      %1385 = vmatprep.subr.bf16.mxu0 0
      %1386 = vmatpush1.bf16.msra.mxu0 0
      %1387 = vmatprep.subr.bf16.mxu0 0
      %1388 = vmatpush1.bf16.msra.mxu0 0
      %1389 = vmatprep.subr.bf16.mxu0 0
      %1390 = vmatpush1.bf16.msra.mxu0 0
      %1391 = vmatprep.subr.bf16.mxu0 0
      %1392 = vmatpush1.bf16.msra.mxu0 0
      %1393 = vmatprep.subr.bf16.mxu0 0
      %1394 = vmatpush1.bf16.msra.mxu0 0
      %1395 = vmatprep.subr.bf16.mxu0 0
      %1396 = vmatpush1.bf16.msra.mxu0 0
      %1397 = vmatprep.subr.bf16.mxu0 0
      %1398 = vmatpush1.bf16.msra.mxu0 0
      %1399 = vmatprep.subr.bf16.mxu0 0
      %1400 = vmatpush1.bf16.msra.mxu0 0
      %1401 = vmatprep.subr.bf16.mxu0 0
      %1402 = vmatpush1.bf16.msra.mxu0 0
      %1403 = vmatprep.subr.bf16.mxu0 0
      %1404 = vmatpush1.bf16.msra.mxu0 0
      %1405 = vmatprep.subr.bf16.mxu0 0
      %1406 = vmatpush1.bf16.msra.mxu0 0
      %1407 = vmatprep.subr.bf16.mxu0 0
      %1408 = vmatpush1.bf16.msra.mxu0 0
      %1409 = vmatprep.subr.bf16.mxu0 0
      %1410 = vmatpush1.bf16.msra.mxu0 0
      %1411 = vmatprep.subr.bf16.mxu0 0
      %1412 = vmatpush1.bf16.msra.mxu0 0
      %1413 = vmatprep.mubr.bf16.mxu0 0
      %1414 = vmatmul.mubr.bf16.gmra.mrb[0].mxu0 %v1327
      %v1415 = vpop.f32.mrb[0].mxu0
      %v1416 = vadd.f32 0.0, %v1415
      %v1417 = vpop.f32.mrb[0].mxu0
      %v1418 = vpop.f32.mrb[0].mxu0
      %v1419 = vadd.f32 0.0, %v1418
      %v1420 = vpop.f32.mrb[0].mxu0
      %1421 = vdwg.mxu0
      %v1422 = vadd.f32 %v1300, %v1373
      %v1423 = vadd.f32 %v1301, %v1375
      %v1424 = vadd.f32 %v1302, %v1416
      %v1425 = vadd.f32 %v1303, %v1377
      %v1426 = vadd.f32 %v1304, %v1379
      %v1427 = vadd.f32 %v1305, %v1419
      %s1428 = scalar_lea.vmem %s410, 64
      %v1429 = vld [vmem:[%s1428] sm:$0xf]
      %v1430 = vld [vmem:[%s1428 + $0x4] sm:$0xf]
      %v1433 = vunpack.c.l.b16 %v1429
      %v1434 = vunpack.c.l.b16 %v1430
      %v1435 = vpack.c.b16 %v1434, %v1433
      %1436 = vrot.lane.b32.xlu0 %v469, 90
      %v1437 = vpop.permute.xlu0 %1436
      %1438 = vrot.lane.b32.xlu0 %v470, 90
      %v1439 = vpop.permute.xlu0 %1438
      %1440 = vrot.lane.b32.xlu0 %v471, 90
      %v1441 = vpop.permute.xlu0 %1440
      %1442 = vrot.lane.b32.xlu0 %v474, 90
      %v1443 = vpop.permute.xlu0 %1442
      %vm1444 = vcmask 736256
      %v1445 = vsel %vm1444, %v1437, %v1439
      %v1446 = vsel %vm1444, %v1439, %v1441
      %v1447 = vsel %vm1444, %v1441, %v1443
      %v1449 = vsel %vm497, %v1435, 0
      %v1452 = vsel %vm501, %v1445, 0
      %v1455 = vsel %vm501, %v1446, 0
      %v1458 = vsel %vm501, %v1447, 0
      %1460 = vmatprep.subr.bf16.mxu0 %v1455
      %1461 = vmatpush1.bf16.msra.mxu0 %v1452
      %1462 = vmatprep.subr.bf16.mxu0 0
      %1463 = vmatpush1.bf16.msra.mxu0 0
      %1464 = vmatprep.subr.bf16.mxu0 0
      %1465 = vmatpush1.bf16.msra.mxu0 0
      %1466 = vmatprep.subr.bf16.mxu0 0
      %1467 = vmatpush1.bf16.msra.mxu0 0
      %1468 = vmatprep.subr.bf16.mxu0 0
      %1469 = vmatpush1.bf16.msra.mxu0 0
      %1470 = vmatprep.subr.bf16.mxu0 0
      %1471 = vmatpush1.bf16.msra.mxu0 0
      %1472 = vmatprep.subr.bf16.mxu0 0
      %1473 = vmatpush1.bf16.msra.mxu0 0
      %1474 = vmatprep.subr.bf16.mxu0 0
      %1475 = vmatpush1.bf16.msra.mxu0 0
      %1476 = vmatprep.subr.bf16.mxu0 0
      %1477 = vmatpush1.bf16.msra.mxu0 0
      %1478 = vmatprep.subr.bf16.mxu0 0
      %1479 = vmatpush1.bf16.msra.mxu0 0
      %1480 = vmatprep.subr.bf16.mxu0 0
      %1481 = vmatpush1.bf16.msra.mxu0 0
      %1482 = vmatprep.subr.bf16.mxu0 0
      %1483 = vmatpush1.bf16.msra.mxu0 0
      %1484 = vmatprep.subr.bf16.mxu0 0
      %1485 = vmatpush1.bf16.msra.mxu0 0
      %1486 = vmatprep.subr.bf16.mxu0 0
      %1487 = vmatpush1.bf16.msra.mxu0 0
      %1488 = vmatprep.subr.bf16.mxu0 0
      %1489 = vmatpush1.bf16.msra.mxu0 0
      %1490 = vmatprep.subr.bf16.mxu0 0
      %1491 = vmatpush1.bf16.msra.mxu0 0
      %1492 = vmatprep.mubr.bf16.mxu0 0
      %1493 = vmatmul.mubr.bf16.gmra.mrb[0].mxu0 %v1449
      %v1494 = vpop.f32.mrb[0].mxu0
      %v1495 = vadd.f32 0.0, %v1494
      %v1496 = vpop.f32.mrb[0].mxu0
      %v1497 = vadd.f32 0.0, %v1496
      %v1498 = vpop.f32.mrb[0].mxu0
      %v1499 = vadd.f32 0.0, %v1498
      %v1500 = vpop.f32.mrb[0].mxu0
      %v1501 = vadd.f32 0.0, %v1500
      %1502 = vdwg.mxu0
      %1503 = vmatprep.subr.bf16.mxu0 0
      %1504 = vmatpush1.bf16.msra.mxu0 %v1458
      %1505 = vmatprep.subr.bf16.mxu0 0
      %1506 = vmatpush1.bf16.msra.mxu0 0
      %1507 = vmatprep.subr.bf16.mxu0 0
      %1508 = vmatpush1.bf16.msra.mxu0 0
      %1509 = vmatprep.subr.bf16.mxu0 0
      %1510 = vmatpush1.bf16.msra.mxu0 0
      %1511 = vmatprep.subr.bf16.mxu0 0
      %1512 = vmatpush1.bf16.msra.mxu0 0
      %1513 = vmatprep.subr.bf16.mxu0 0
      %1514 = vmatpush1.bf16.msra.mxu0 0
      %1515 = vmatprep.subr.bf16.mxu0 0
      %1516 = vmatpush1.bf16.msra.mxu0 0
      %1517 = vmatprep.subr.bf16.mxu0 0
      %1518 = vmatpush1.bf16.msra.mxu0 0
      %1519 = vmatprep.subr.bf16.mxu0 0
      %1520 = vmatpush1.bf16.msra.mxu0 0
      %1521 = vmatprep.subr.bf16.mxu0 0
      %1522 = vmatpush1.bf16.msra.mxu0 0
      %1523 = vmatprep.subr.bf16.mxu0 0
      %1524 = vmatpush1.bf16.msra.mxu0 0
      %1525 = vmatprep.subr.bf16.mxu0 0
      %1526 = vmatpush1.bf16.msra.mxu0 0
      %1527 = vmatprep.subr.bf16.mxu0 0
      %1528 = vmatpush1.bf16.msra.mxu0 0
      %1529 = vmatprep.subr.bf16.mxu0 0
      %1530 = vmatpush1.bf16.msra.mxu0 0
      %1531 = vmatprep.subr.bf16.mxu0 0
      %1532 = vmatpush1.bf16.msra.mxu0 0
      %1533 = vmatprep.subr.bf16.mxu0 0
      %1534 = vmatpush1.bf16.msra.mxu0 0
      %1535 = vmatprep.mubr.bf16.mxu0 0
      %1536 = vmatmul.mubr.bf16.gmra.mrb[0].mxu0 %v1449
      %v1537 = vpop.f32.mrb[0].mxu0
      %v1538 = vadd.f32 0.0, %v1537
      %v1539 = vpop.f32.mrb[0].mxu0
      %v1540 = vpop.f32.mrb[0].mxu0
      %v1541 = vadd.f32 0.0, %v1540
      %v1542 = vpop.f32.mrb[0].mxu0
      %1543 = vdwg.mxu0
      %v1544 = vadd.f32 %v1422, %v1495
      %v1545 = vadd.f32 %v1423, %v1497
      %v1546 = vadd.f32 %v1424, %v1538
      %v1547 = vadd.f32 %v1425, %v1499
      %v1548 = vadd.f32 %v1426, %v1501
      %v1549 = vadd.f32 %v1427, %v1541
      %1550 = vst [vmem:[%s429] sm:$0xff] %v1544
      %1551 = vst [vmem:[%s429 + $0x8] sm:$0xff] %v1545
      %1552 = vst [vmem:[%s429 + $0x10] sm:$0xff] %v1546
      %1553 = vst [vmem:[%s429 + $0x18] sm:$0xff] %v1547
      %1554 = vst [vmem:[%s429 + $0x20] sm:$0xff] %v1548
      %1555 = vst [vmem:[%s429 + $0x28] sm:$0xff] %v1549
      %v1556 = vld [vmem:[%s415] sm:$0x7]
      %v1558 = vlaneseq
      %v1559 = vshrl.u32 %v1558, 7
      %v1560 = vsub.s32 0, %v1559
      %v1561 = vrot.slane %v1556, %v1560
      %v1562 = vlaneseq
      %v1563 = vshrl.u32 %v1562, 7
      %v1564 = vsub.s32 1, %v1563
      %v1565 = vrot.slane %v1556, %v1564
      %v1566 = vlaneseq
      %v1567 = vshrl.u32 %v1566, 7
      %v1568 = vsub.s32 2, %v1567
      %v1569 = vrot.slane %v1556, %v1568
      %vm1573 = vcmask 1040384
      %v1574 = vsel %vm1573, %v1561, 0.0
      %v1575 = vsel %vm1573, %v1565, 0.0
      %v1576 = vadd.f32 %v1574, %v1575
      %v1577 = vsel %vm1573, %v1569, 0.0
      %v1578 = vadd.f32 %v1576, %v1577
      %1579 = vadd.xlane.f32.xlu0 %v1578
      %v1580 = vpop.xlane.xlu0 %1579
      %v1581 = vrot.slane %v1580, 4
      %v1582 = vadd.f32 %v1580, %v1581
      %v1583 = vrot.slane %v1582, 2
      %v1584 = vadd.f32 %v1582, %v1583
      %v1585 = vrot.slane %v1584, 1
      %v1586 = vadd.f32 %v1584, %v1585
      %s1587 = vtos %v1586
      %s1588 = smax.f32 %s1587, 1.0
      %v1589 = vmul.f32 %v1544, %v1561
      %v1590 = vmul.f32 %v1545, %v1565
      %v1591 = vmul.f32 %v1546, %v1569
      %v1592 = vmul.f32 %v1547, %v1561
      %v1593 = vmul.f32 %v1548, %v1565
      %v1594 = vmul.f32 %v1549, %v1569
      %v1595 = vadd.f32 %v1589, %v1590
      %v1596 = vadd.f32 %v1595, %v1591
      %1597 = vadd.xlane.f32.xlu0 %v1596
      %v1598 = vpop.xlane.xlu0 %1597
      %v1599 = vadd.f32 %v1592, %v1593
      %v1600 = vadd.f32 %v1599, %v1594
      %1601 = vadd.xlane.f32.xlu0 %v1600
      %v1602 = vpop.xlane.xlu0 %1601
      %v1603 = vstv %s1588
      %v1604 = vrcp.pop %v1603
      %v1605 = vmul.f32 %v1598, %v1604
      %v1606 = vmul.f32 %v1602, %v1604
      %v1607 = vsub.f32 %v1544, %v1605
      %v1608 = vsub.f32 %v1545, %v1605
      %v1609 = vsub.f32 %v1546, %v1605
      %v1610 = vsub.f32 %v1547, %v1606
      %v1611 = vsub.f32 %v1548, %v1606
      %v1612 = vsub.f32 %v1549, %v1606
      %v1613 = vmul.f32 %v1607, %v1561
      %v1614 = vmul.f32 %v1608, %v1565
      %v1615 = vmul.f32 %v1609, %v1569
      %v1616 = vmul.f32 %v1610, %v1561
      %v1617 = vmul.f32 %v1611, %v1565
      %v1618 = vmul.f32 %v1612, %v1569
      %v1619 = vmul.f32 %v1613, %v1613
      %v1620 = vmul.f32 %v1614, %v1614
      %v1621 = vmul.f32 %v1615, %v1615
      %v1622 = vmul.f32 %v1616, %v1616
      %v1623 = vmul.f32 %v1617, %v1617
      %v1624 = vmul.f32 %v1618, %v1618
      %v1625 = vadd.f32 %v1619, %v1620
      %v1626 = vadd.f32 %v1625, %v1621
      %1627 = vadd.xlane.f32.xlu0 %v1626
      %v1628 = vpop.xlane.xlu0 %1627
      %v1629 = vadd.f32 %v1622, %v1623
      %v1630 = vadd.f32 %v1629, %v1624
      %1631 = vadd.xlane.f32.xlu0 %v1630
      %v1632 = vpop.xlane.xlu0 %1631
      %vm1633 = vcmask 7168
      %1634 = vst.msk [vmem:[%s444] sm:$0xff] %vm1633, %v1598
      %1635 = vst.msk [vmem:[%s444 + $0x8] sm:$0xff] %vm1633, %v1602
      %1636 = vst.msk [vmem:[%s458] sm:$0xff] %vm1633, %v1628
      %1637 = vst.msk [vmem:[%s458 + $0x8] sm:$0xff] %vm1633, %v1632
      %s1638 = smul.u32 2, %s24
      %s1639 = smul.u32 3, %s25
      %p1640 = scmp.lt.s32.totalorder %s23, 1
      %s1641 = scalar_select %p1640, %s23, 1
      %p1642 = scmp.lt.s32.totalorder %s1638, 1
      %s1643 = scalar_select %p1642, %s1638, 1
      %p1644 = scmp.lt.s32.totalorder %s1639, 2
      %s1645 = scalar_select %p1644, %s1639, 2
      %s1646 = smul.addr %s1643, 3
      %s1647 = sadd.s32 %s1645, %s1646
      %s1648 = smul.addr %s1641, 6
      %s1649 = sadd.s32 %s1647, %s1648
      %s1650 = smul.addr %s1649, 8
      %s1651 = scalar_lea.vmem %s4, %s1650
      %s1652 = smul.u32 2, %s24
      %p1653 = scmp.lt.s32.totalorder %s23, 1
      %s1654 = scalar_select %p1653, %s23, 1
      %p1655 = scmp.lt.s32.totalorder %s25, 0
      %s1656 = scalar_select %p1655, %s25, 0
      %p1657 = scmp.lt.s32.totalorder %s1652, 1
      %s1658 = scalar_select %p1657, %s1652, 1
      %s1659 = smul.addr %s1656, 2
      %s1660 = sadd.s32 %s1658, %s1659
      %s1661 = smul.addr %s1654, 2
      %s1662 = sadd.s32 %s1660, %s1661
      %s1663 = smul.addr %s1662, 8
      %s1664 = scalar_lea.vmem %s5, %s1663
      %s1665 = smul.u32 2, %s24
      %p1666 = scmp.lt.s32.totalorder %s23, 1
      %s1667 = scalar_select %p1666, %s23, 1
      %p1668 = scmp.lt.s32.totalorder %s25, 0
      %s1669 = scalar_select %p1668, %s25, 0
      %p1670 = scmp.lt.s32.totalorder %s1665, 1
      %s1671 = scalar_select %p1670, %s1665, 1
      %s1672 = smul.addr %s1669, 2
      %s1673 = sadd.s32 %s1671, %s1672
      %s1674 = smul.addr %s1667, 2
      %s1675 = sadd.s32 %s1673, %s1674
      %s1676 = smul.addr %s1675, 8
      %s1677 = scalar_lea.vmem %s6, %s1676
      // Predicated region
      $region37: #{conv_block.2} parent=35 // pred_check
        %p1678 = pneg %p169
      $region38: #{conv_block.2} parent=35 // pred_check_branch
        %1680 = sbr.rel (%p1678) target = $region40
      $region39: #{conv_block.2} parent=35 // pred_region
        %s1681 = smul.u32 2, %s24
        %s1682 = smul.u32 3, %s25
      $region40: #{conv_block.2} parent=35 // pred_fallthru
        _
      // Predicated region
      $region41: #{conv_block.2} parent=35 // pred_check
        %p1683 = pneg %p199
      $region42: #{conv_block.2} parent=35 // pred_check_branch
        %1685 = sbr.rel (%p1683) target = $region44
      $region43: #{conv_block.2} parent=35 // pred_region
        %s1686 = smul.u32 2, %s24
      $region44: #{conv_block.2} parent=35 // pred_fallthru
        _
      // Predicated region
      $region45: #{conv_block.2} parent=35 // pred_check
        %p1687 = pneg %p229
      $region46: #{conv_block.2} parent=35 // pred_check_branch
        %1689 = sbr.rel (%p1687) target = $region48
      $region47: #{conv_block.2} parent=35 // pred_region
        %s1690 = smul.u32 2, %s24
      $region48: #{conv_block.2} parent=35 // pred_fallthru
        _
    $region36: #{conv_block.2} parent=5 // pred_fallthru
      _
    %p1691 = scmp.le.s32.totalorder 2, %s13
    // Predicated region
    $region49: #{conv_block.2} parent=5 // pred_check
      %p1692 = pneg %p1691
    $region50: #{conv_block.2} parent=5 // pred_check_branch
      %1694 = sbr.rel (%p1692) target = $region52
    $region51: #{conv_block.2} parent=5 // pred_region
      %s1695 = ssub.s32 %s13, 2
      // Predicated region
      $region53: #{conv_block.2} parent=51 // pred_check
        %p1696 = pneg %p175
      $region54: #{conv_block.2} parent=51 // pred_check_branch
        %1698 = sbr.rel (%p1696) target = $region56
      $region55: #{conv_block.2} parent=51 // pred_region
        %s1699 = smul.u32 2, %s27
        %s1700 = smul.u32 3, %s28
        %p1701 = scmp.lt.s32.totalorder %s26, 1
        %s1702 = scalar_select %p1701, %s26, 1
        %p1703 = scmp.lt.s32.totalorder %s1699, 1
        %s1704 = scalar_select %p1703, %s1699, 1
        %p1705 = scmp.lt.s32.totalorder %s1700, 2
        %s1706 = scalar_select %p1705, %s1700, 2
        %s1707 = smul.addr %s1704, 3
        %s1708 = sadd.s32 %s1706, %s1707
        %s1709 = smul.addr %s1702, 6
        %s1710 = sadd.s32 %s1708, %s1709
        %s1711 = smul.addr %s1710, 8
        %s1712 = scalar_lea.vmem %s4, %s1711
      $region56: #{conv_block.2} parent=51 // pred_fallthru
        _
      // Predicated region
      $region57: #{conv_block.2} parent=51 // pred_check
        %p1713 = pneg %p205
      $region58: #{conv_block.2} parent=51 // pred_check_branch
        %1715 = sbr.rel (%p1713) target = $region60
      $region59: #{conv_block.2} parent=51 // pred_region
        %s1716 = smul.u32 2, %s27
        %p1717 = scmp.lt.s32.totalorder %s26, 1
        %s1718 = scalar_select %p1717, %s26, 1
        %p1719 = scmp.lt.s32.totalorder %s28, 0
        %s1720 = scalar_select %p1719, %s28, 0
        %p1721 = scmp.lt.s32.totalorder %s1716, 1
        %s1722 = scalar_select %p1721, %s1716, 1
        %s1723 = smul.addr %s1720, 2
        %s1724 = sadd.s32 %s1722, %s1723
        %s1725 = smul.addr %s1718, 2
        %s1726 = sadd.s32 %s1724, %s1725
        %s1727 = smul.addr %s1726, 8
        %s1728 = scalar_lea.vmem %s5, %s1727
      $region60: #{conv_block.2} parent=51 // pred_fallthru
        _
      // Predicated region
      $region61: #{conv_block.2} parent=51 // pred_check
        %p1729 = pneg %p235
      $region62: #{conv_block.2} parent=51 // pred_check_branch
        %1731 = sbr.rel (%p1729) target = $region64
      $region63: #{conv_block.2} parent=51 // pred_region
        %s1732 = smul.u32 2, %s27
        %p1733 = scmp.lt.s32.totalorder %s26, 1
        %s1734 = scalar_select %p1733, %s26, 1
        %p1735 = scmp.lt.s32.totalorder %s28, 0
        %s1736 = scalar_select %p1735, %s28, 0
        %p1737 = scmp.lt.s32.totalorder %s1732, 1
        %s1738 = scalar_select %p1737, %s1732, 1
        %s1739 = smul.addr %s1736, 2
        %s1740 = sadd.s32 %s1738, %s1739
        %s1741 = smul.addr %s1734, 2
        %s1742 = sadd.s32 %s1740, %s1741
        %s1743 = smul.addr %s1742, 8
        %s1744 = scalar_lea.vmem %s6, %s1743
      $region64: #{conv_block.2} parent=51 // pred_fallthru
        _
    $region52: #{conv_block.2} parent=5 // pred_fallthru
      _
  $region6: #{conv_block.2} parent=0 // loop_footer
    %s17 = sadd.s32 1, %s13
  $region7: #{conv_block.2} parent=0 // loop_footer_branch
    %12 = sbr.rel target = $region3
  $region8: #{conv_block.2} parent=0 // loop_exit
    _

</llo_original>
